<compile_context>
chip_gen: v7x
topology: tpu7x:2x2x1
jax: 0.10.0
libtpu: 0.0.40
codegen_flags: <defaults>
</compile_context>

<pallas_src>
import jax
import jax.numpy as jnp
from jax.experimental import pallas as pl
from jax.experimental.pallas import tpu as pltpu


# ----------------------------------------------------------------------------
# Config (small demo shapes consistent with the module: hidden 512, out 1)
# ----------------------------------------------------------------------------
N_CLASSES = 10
IMG_SIZE = 16                 # small spatial size -> img_size**2 = 256 (lane-aligned)
IMG2 = IMG_SIZE ** 2
HIDDEN = 512
BATCH = 8


# ----------------------------------------------------------------------------
# Pallas kernel: full 4-layer MLP hot path
# ----------------------------------------------------------------------------
def _disc_mlp_kernel(x_ref, e_ref,
                     w1_ref, b1_ref,
                     w2_ref, b2_ref,
                     w3_ref, b3_ref,
                     w4_ref, b4_ref,
                     o_ref):
    def leaky(h):                       # LeakyReLU(0.2), f32 on the VPU
        return jnp.where(h >= 0, h, 0.2 * h)

    # Layer 1: img(bf16) @ W1_img(bf16) -> f32, + folded label embedding + bias
    h = jnp.dot(x_ref[...], w1_ref[...], preferred_element_type=jnp.float32)
    h = leaky(h + e_ref[...] + b1_ref[...])

    # Layer 2 (Dropout(0.4) -> identity in eval mode)
    # TODO(synk): training-mode dropout (pltpu.prng_random_bits mask) not emitted.
    h = jnp.dot(h.astype(jnp.bfloat16), w2_ref[...],
                preferred_element_type=jnp.float32)
    h = leaky(h + b2_ref[...])

    # Layer 3 (Dropout identity again)
    h = jnp.dot(h.astype(jnp.bfloat16), w3_ref[...],
                preferred_element_type=jnp.float32)
    h = leaky(h + b3_ref[...])

    # Layer 4 (N=1): VPU multiply + lane reduce instead of a padded MXU pass.
    o_ref[...] = jnp.sum(h * w4_ref[...], axis=-1, keepdims=True) + b4_ref[...]


# ----------------------------------------------------------------------------
# Wrapper: embedding fold, batch padding/tiling, pallas_call
# ----------------------------------------------------------------------------
def discriminator_forward(image, label, params):
    """image: (B, 1, H, W) float32 NCHW; label: (B,) int32 -> (B, 1) float32."""
    B = image.shape[0]
    img_flat = image.reshape(B, IMG2).astype(jnp.bfloat16)      # (B, 256)

    # Fold the label embedding into layer 1:
    #   cat([img, emb(label)]) @ W1 == img @ W1[:256] + (emb @ W1[256:])[label]
    emb_tbl = jnp.dot(params["emb"], params["w1_emb"],
                      preferred_element_type=jnp.float32)        # (n_classes, 512)
    emb_proj = jnp.take(emb_tbl, label, axis=0)                  # (B, 512) f32

    # Batch tiling: pad to a multiple of the batch tile; weights stay resident.
    b8 = ((B + 7) // 8) * 8
    tm = min(256, b8)                    # 256 fills v6e/v7x MXU; small batches stay small
    b_pad = ((b8 + tm - 1) // tm) * tm
    if b_pad != B:
        img_flat = jnp.pad(img_flat, ((0, b_pad - B), (0, 0)))
        emb_proj = jnp.pad(emb_proj, ((0, b_pad - B), (0, 0)))

    grid = (b_pad // tm,)

    def batch_spec(cols):
        return pl.BlockSpec((tm, cols), lambda i: (i, 0))

    def resident_spec(shape):            # constant block -> stays in VMEM across steps
        return pl.BlockSpec(shape, lambda i: (0, 0))

    out = pl.pallas_call(
        _disc_mlp_kernel,
        out_shape=jax.ShapeDtypeStruct((b_pad, 1), jnp.float32),
        grid=grid,
        in_specs=[
            batch_spec(IMG2),                       # x           (bf16)
            batch_spec(HIDDEN),                     # emb_proj    (f32)
            resident_spec((IMG2, HIDDEN)),          # w1_img      (bf16)
            resident_spec((1, HIDDEN)),             # b1          (f32)
            resident_spec((HIDDEN, HIDDEN)),        # w2          (bf16)
            resident_spec((1, HIDDEN)),             # b2          (f32)
            resident_spec((HIDDEN, HIDDEN)),        # w3          (bf16)
            resident_spec((1, HIDDEN)),             # b3          (f32)
            resident_spec((1, HIDDEN)),             # w4 row      (f32)
            resident_spec((1, 1)),                  # b4          (f32)
        ],
        out_specs=pl.BlockSpec((tm, 1), lambda i: (i, 0)),
        compiler_params=pltpu.CompilerParams(
            dimension_semantics=("parallel",)),
    )(img_flat, emb_proj,
      params["w1_img"], params["b1"],
      params["w2"], params["b2"],
      params["w3"], params["b3"],
      params["w4"], params["b4"])

    return out[:B]                                               # (B, 1)


# ----------------------------------------------------------------------------
# Deterministic parameter init (PyTorch-default-like uniform(+-1/sqrt(fan_in)))
# ----------------------------------------------------------------------------
def init_params(key):
    ks = jax.random.split(key, 9)

    def linear(kw, kb, fan_in, fan_out):
        bound = 1.0 / float(fan_in) ** 0.5
        w = jax.random.uniform(kw, (fan_in, fan_out), jnp.float32, -bound, bound)
        b = jax.random.uniform(kb, (1, fan_out), jnp.float32, -bound, bound)
        return w, b

    emb = jax.random.normal(ks[0], (N_CLASSES, N_CLASSES), jnp.float32)
    d_in = IMG2 + N_CLASSES
    w1, b1 = linear(ks[1], ks[2], d_in, HIDDEN)
    w2, b2 = linear(ks[3], ks[4], HIDDEN, HIDDEN)
    w3, b3 = linear(ks[5], ks[6], HIDDEN, HIDDEN)
    w4, b4 = linear(ks[7], ks[8], HIDDEN, 1)
    return dict(
        emb=emb,
        w1_img=w1[:IMG2].astype(jnp.bfloat16),   # image half of W1 (bf16, DMA-halved)
        w1_emb=w1[IMG2:],                        # label half, folded in wrapper (f32)
        b1=b1,
        w2=w2.astype(jnp.bfloat16), b2=b2,
        w3=w3.astype(jnp.bfloat16), b3=b3,
        w4=w4.T,                                 # (1, 512) row, f32 (tiny)
        b4=b4.reshape(1, 1),
    )


# ----------------------------------------------------------------------------
# Pure-JAX reference mirroring the kernel math (same dtype path)
# ----------------------------------------------------------------------------
def reference_forward(image, label, p):
    B = image.shape[0]

    def leaky(h):
        return jnp.where(h >= 0, h, 0.2 * h)

    x = image.reshape(B, IMG2).astype(jnp.bfloat16)
    e = jnp.take(jnp.dot(p["emb"], p["w1_emb"],
                         preferred_element_type=jnp.float32), label, axis=0)
    h = leaky(jnp.dot(x, p["w1_img"], preferred_element_type=jnp.float32)
              + e + p["b1"])
    h = leaky(jnp.dot(h.astype(jnp.bfloat16), p["w2"],
                      preferred_element_type=jnp.float32) + p["b2"])
    h = leaky(jnp.dot(h.astype(jnp.bfloat16), p["w3"],
                      preferred_element_type=jnp.float32) + p["b3"])
    return jnp.sum(h * p["w4"], axis=-1, keepdims=True) + p["b4"]


if __name__ == "__main__":
    key = jax.random.PRNGKey(0)
    k_img, k_lbl, k_par = jax.random.split(key, 3)

    image = jax.random.normal(k_img, (BATCH, 1, IMG_SIZE, IMG_SIZE), jnp.float32)
    label = jax.random.randint(k_lbl, (BATCH,), 0, N_CLASSES, jnp.int32)
    params = init_params(k_par)

    out = discriminator_forward(image, label, params)
    out = jax.block_until_ready(out)

    ref = reference_forward(image, label, params)
    assert out.shape == (BATCH, 1)
    assert jnp.allclose(out, ref, atol=1e-3, rtol=1e-3), (
        "mismatch vs reference, max abs diff = "
        f"{float(jnp.max(jnp.abs(out - ref)))}")

    print("KERNEL_OK")
</pallas_src>

<mosaic_0001>
module attributes {stable_mosaic.version = 11 : i64} {
  func.func @_disc_mlp_kernel(%arg0: i32, %arg1: memref<8x256xbf16, #tpu.memory_space<vmem>>, %arg2: memref<8x512xf32, #tpu.memory_space<vmem>>, %arg3: memref<256x512xbf16, #tpu.memory_space<vmem>>, %arg4: memref<1x512xf32, #tpu.memory_space<vmem>>, %arg5: memref<512x512xbf16, #tpu.memory_space<vmem>>, %arg6: memref<1x512xf32, #tpu.memory_space<vmem>>, %arg7: memref<512x512xbf16, #tpu.memory_space<vmem>>, %arg8: memref<1x512xf32, #tpu.memory_space<vmem>>, %arg9: memref<1x512xf32, #tpu.memory_space<vmem>>, %arg10: memref<1x1xf32, #tpu.memory_space<vmem>>, %arg11: memref<8x1xf32, #tpu.memory_space<vmem>>) attributes {dimension_semantics = [#tpu.dimension_semantics<parallel>], iteration_bounds = array<i64: 1>, scalar_prefetch = 0 : i64, scratch_operands = 0 : i64, tpu.core_type = #tpu.core_type<tc>, window_params = [{transform_indices = @transform_0, window_bounds = array<i64: 8, 256>}, {transform_indices = @transform_1, window_bounds = array<i64: 8, 512>}, {pipeline_mode = #tpu.pipeline_mode<synchronous>, transform_indices = @transform_2, window_bounds = array<i64: 256, 512>}, {pipeline_mode = #tpu.pipeline_mode<synchronous>, transform_indices = @transform_3, window_bounds = array<i64: 1, 512>}, {pipeline_mode = #tpu.pipeline_mode<synchronous>, transform_indices = @transform_4, window_bounds = array<i64: 512, 512>}, {pipeline_mode = #tpu.pipeline_mode<synchronous>, transform_indices = @transform_5, window_bounds = array<i64: 1, 512>}, {pipeline_mode = #tpu.pipeline_mode<synchronous>, transform_indices = @transform_6, window_bounds = array<i64: 512, 512>}, {pipeline_mode = #tpu.pipeline_mode<synchronous>, transform_indices = @transform_7, window_bounds = array<i64: 1, 512>}, {pipeline_mode = #tpu.pipeline_mode<synchronous>, transform_indices = @transform_8, window_bounds = array<i64: 1, 512>}, {pipeline_mode = #tpu.pipeline_mode<synchronous>, transform_indices = @transform_9, window_bounds = array<i64: 1, 1>}, {transform_indices = @transform_10, window_bounds = array<i64: 8, 1>}]} {
    %c0 = arith.constant 0 : index
    %c0_0 = arith.constant 0 : index
    %0 = vector.load %arg1[%c0, %c0_0] : memref<8x256xbf16, #tpu.memory_space<vmem>>, vector<8x256xbf16>
    %c0_1 = arith.constant 0 : index
    %c0_2 = arith.constant 0 : index
    %1 = vector.load %arg3[%c0_1, %c0_2] : memref<256x512xbf16, #tpu.memory_space<vmem>>, vector<256x512xbf16>
    %cst = arith.constant dense<0.000000e+00> : vector<8x512xf32>
    %2 = tpu.matmul %0, %1, %cst {dimension_numbers = #tpu.dot_dimension_numbers<[1], [0], [0], [1], [0, 0, 1, 1], [], []>} : vector<8x256xbf16>, vector<256x512xbf16>, vector<8x512xf32> -> vector<8x512xf32>
    %c0_3 = arith.constant 0 : index
    %c0_4 = arith.constant 0 : index
    %3 = vector.load %arg2[%c0_3, %c0_4] : memref<8x512xf32, #tpu.memory_space<vmem>>, vector<8x512xf32>
    %4 = arith.addf %2, %3 : vector<8x512xf32>
    %c0_5 = arith.constant 0 : index
    %c0_6 = arith.constant 0 : index
    %5 = vector.load %arg4[%c0_5, %c0_6] : memref<1x512xf32, #tpu.memory_space<vmem>>, vector<1x512xf32>
    %6 = vector.broadcast %5 : vector<1x512xf32> to vector<8x512xf32>
    %7 = arith.addf %4, %6 : vector<8x512xf32>
    %cst_7 = arith.constant 0.000000e+00 : f32
    %8 = vector.broadcast %cst_7 : f32 to vector<8x512xf32>
    %9 = arith.cmpf oge, %7, %8 : vector<8x512xf32>
    %cst_8 = arith.constant 2.000000e-01 : f32
    %10 = vector.broadcast %cst_8 : f32 to vector<8x512xf32>
    %11 = arith.mulf %10, %7 : vector<8x512xf32>
    %12 = arith.select %9, %7, %11 : vector<8x512xi1>, vector<8x512xf32>
    %13 = arith.truncf %12 : vector<8x512xf32> to vector<8x512xbf16>
    %c0_9 = arith.constant 0 : index
    %c0_10 = arith.constant 0 : index
    %14 = vector.load %arg5[%c0_9, %c0_10] : memref<512x512xbf16, #tpu.memory_space<vmem>>, vector<512x512xbf16>
    %cst_11 = arith.constant dense<0.000000e+00> : vector<8x512xf32>
    %15 = tpu.matmul %13, %14, %cst_11 {dimension_numbers = #tpu.dot_dimension_numbers<[1], [0], [0], [1], [0, 0, 1, 1], [], []>} : vector<8x512xbf16>, vector<512x512xbf16>, vector<8x512xf32> -> vector<8x512xf32>
    %c0_12 = arith.constant 0 : index
    %c0_13 = arith.constant 0 : index
    %16 = vector.load %arg6[%c0_12, %c0_13] : memref<1x512xf32, #tpu.memory_space<vmem>>, vector<1x512xf32>
    %17 = vector.broadcast %16 : vector<1x512xf32> to vector<8x512xf32>
    %18 = arith.addf %15, %17 : vector<8x512xf32>
    %cst_14 = arith.constant 0.000000e+00 : f32
    %19 = vector.broadcast %cst_14 : f32 to vector<8x512xf32>
    %20 = arith.cmpf oge, %18, %19 : vector<8x512xf32>
    %cst_15 = arith.constant 2.000000e-01 : f32
    %21 = vector.broadcast %cst_15 : f32 to vector<8x512xf32>
    %22 = arith.mulf %21, %18 : vector<8x512xf32>
    %23 = arith.select %20, %18, %22 : vector<8x512xi1>, vector<8x512xf32>
    %24 = arith.truncf %23 : vector<8x512xf32> to vector<8x512xbf16>
    %c0_16 = arith.constant 0 : index
    %c0_17 = arith.constant 0 : index
    %25 = vector.load %arg7[%c0_16, %c0_17] : memref<512x512xbf16, #tpu.memory_space<vmem>>, vector<512x512xbf16>
    %cst_18 = arith.constant dense<0.000000e+00> : vector<8x512xf32>
    %26 = tpu.matmul %24, %25, %cst_18 {dimension_numbers = #tpu.dot_dimension_numbers<[1], [0], [0], [1], [0, 0, 1, 1], [], []>} : vector<8x512xbf16>, vector<512x512xbf16>, vector<8x512xf32> -> vector<8x512xf32>
    %c0_19 = arith.constant 0 : index
    %c0_20 = arith.constant 0 : index
    %27 = vector.load %arg8[%c0_19, %c0_20] : memref<1x512xf32, #tpu.memory_space<vmem>>, vector<1x512xf32>
    %28 = vector.broadcast %27 : vector<1x512xf32> to vector<8x512xf32>
    %29 = arith.addf %26, %28 : vector<8x512xf32>
    %cst_21 = arith.constant 0.000000e+00 : f32
    %30 = vector.broadcast %cst_21 : f32 to vector<8x512xf32>
    %31 = arith.cmpf oge, %29, %30 : vector<8x512xf32>
    %cst_22 = arith.constant 2.000000e-01 : f32
    %32 = vector.broadcast %cst_22 : f32 to vector<8x512xf32>
    %33 = arith.mulf %32, %29 : vector<8x512xf32>
    %34 = arith.select %31, %29, %33 : vector<8x512xi1>, vector<8x512xf32>
    %c0_23 = arith.constant 0 : index
    %c0_24 = arith.constant 0 : index
    %35 = vector.load %arg9[%c0_23, %c0_24] : memref<1x512xf32, #tpu.memory_space<vmem>>, vector<1x512xf32>
    %36 = vector.broadcast %35 : vector<1x512xf32> to vector<8x512xf32>
    %37 = arith.mulf %34, %36 : vector<8x512xf32>
    %cst_25 = arith.constant dense<0.000000e+00> : vector<8xf32>
    %38 = vector.multi_reduction <add>, %37, %cst_25 [1] : vector<8x512xf32> to vector<8xf32>
    %39 = vector.shape_cast %38 : vector<8xf32> to vector<8x1xf32>
    %c0_26 = arith.constant 0 : index
    %c0_27 = arith.constant 0 : index
    %40 = vector.load %arg10[%c0_26, %c0_27] : memref<1x1xf32, #tpu.memory_space<vmem>>, vector<1x1xf32>
    %41 = vector.broadcast %40 : vector<1x1xf32> to vector<8x1xf32>
    %42 = arith.addf %39, %41 : vector<8x1xf32>
    %c0_28 = arith.constant 0 : index
    %c0_29 = arith.constant 0 : index
    %43 = vector.load %arg11[%c0_28, %c0_29] : memref<8x1xf32, #tpu.memory_space<vmem>>, vector<8x1xf32>
    tpu.vector_store %arg11[%c0_28, %c0_29], %42 {strides = array<i32>} : memref<8x1xf32, #tpu.memory_space<vmem>>, vector<8x1xf32>,
    return
  }
  func.func @transform_0(%arg0: i32) -> (i32, i32) {
    %c0_i32 = arith.constant 0 : i32
    %c0_i32_0 = arith.constant 0 : i32
    return %arg0, %c0_i32 : i32, i32
  }
  func.func @transform_1(%arg0: i32) -> (i32, i32) {
    %c0_i32 = arith.constant 0 : i32
    %c0_i32_0 = arith.constant 0 : i32
    return %arg0, %c0_i32 : i32, i32
  }
  func.func @transform_2(%arg0: i32) -> (i32, i32) {
    %c0_i32 = arith.constant 0 : i32
    %c0_i32_0 = arith.constant 0 : i32
    %c0_i32_1 = arith.constant 0 : i32
    return %c0_i32, %c0_i32_0 : i32, i32
  }
  func.func @transform_3(%arg0: i32) -> (i32, i32) {
    %c0_i32 = arith.constant 0 : i32
    %c0_i32_0 = arith.constant 0 : i32
    %c0_i32_1 = arith.constant 0 : i32
    return %c0_i32, %c0_i32_0 : i32, i32
  }
  func.func @transform_4(%arg0: i32) -> (i32, i32) {
    %c0_i32 = arith.constant 0 : i32
    %c0_i32_0 = arith.constant 0 : i32
    %c0_i32_1 = arith.constant 0 : i32
    return %c0_i32, %c0_i32_0 : i32, i32
  }
  func.func @transform_5(%arg0: i32) -> (i32, i32) {
    %c0_i32 = arith.constant 0 : i32
    %c0_i32_0 = arith.constant 0 : i32
    %c0_i32_1 = arith.constant 0 : i32
    return %c0_i32, %c0_i32_0 : i32, i32
  }
  func.func @transform_6(%arg0: i32) -> (i32, i32) {
    %c0_i32 = arith.constant 0 : i32
    %c0_i32_0 = arith.constant 0 : i32
    %c0_i32_1 = arith.constant 0 : i32
    return %c0_i32, %c0_i32_0 : i32, i32
  }
  func.func @transform_7(%arg0: i32) -> (i32, i32) {
    %c0_i32 = arith.constant 0 : i32
    %c0_i32_0 = arith.constant 0 : i32
    %c0_i32_1 = arith.constant 0 : i32
    return %c0_i32, %c0_i32_0 : i32, i32
  }
  func.func @transform_8(%arg0: i32) -> (i32, i32) {
    %c0_i32 = arith.constant 0 : i32
    %c0_i32_0 = arith.constant 0 : i32
    %c0_i32_1 = arith.constant 0 : i32
    return %c0_i32, %c0_i32_0 : i32, i32
  }
  func.func @transform_9(%arg0: i32) -> (i32, i32) {
    %c0_i32 = arith.constant 0 : i32
    %c0_i32_0 = arith.constant 0 : i32
    %c0_i32_1 = arith.constant 0 : i32
    return %c0_i32, %c0_i32_0 : i32, i32
  }
  func.func @transform_10(%arg0: i32) -> (i32, i32) {
    %c0_i32 = arith.constant 0 : i32
    %c0_i32_0 = arith.constant 0 : i32
    return %arg0, %c0_i32 : i32, i32
  }
}

</mosaic_0001>

<llo_original>
// kernel: tpu_custom_call.1
$region0: #{tpu_custom_call.1}
  #allocation0 [shape = 'u32[]', space=smem, size = 0x4, offset = 0x4, fixed_abs, tag = 'smem constant byte address 0x4 - core index']
  #allocation1 [shape = 'u32[144,128]{1,0:T(1,128)}', space=vmem, size = 0x12000, scoped, tag = 'internal scratch']
  #allocation2 [shape = 'f32[1,1]{1,0:T(1,128)S(1)}', space=vmem, size = 0x200, scoped, tag = 'scoped memory for tpu_custom_call.1']
  %s0 = inlined_call_operand.hbm [shape: bf16[8,256], index: 0, kind: input, shape index: {}]
  %s1 = inlined_call_operand.hbm [shape: f32[8,512], index: 1, kind: input, shape index: {}]
  %s2 = inlined_call_operand.hbm [shape: bf16[256,512], index: 2, kind: input, shape index: {}]
  %s3 = inlined_call_operand.vmem [shape: f32[1,512], index: 3, kind: input, shape index: {}]
  %s4 = inlined_call_operand.hbm [shape: bf16[512,512], index: 4, kind: input, shape index: {}]
  %s5 = inlined_call_operand.vmem [shape: f32[1,512], index: 5, kind: input, shape index: {}]
  %s6 = inlined_call_operand.hbm [shape: bf16[512,512], index: 6, kind: input, shape index: {}]
  %s7 = inlined_call_operand.vmem [shape: f32[1,512], index: 7, kind: input, shape index: {}]
  %s8 = inlined_call_operand.vmem [shape: f32[1,512], index: 8, kind: input, shape index: {}]
  %s9 = inlined_call_operand.<no memory space> [shape: f32[1,1], index: 9, kind: input, shape index: {}]
  %s10 = inlined_call_operand.vmem [shape: f32[8,1], index: 10, kind: output, shape index: {}]
  %s11 = sld [smem:[#allocation0]]
  $region70: #{tpu_custom_call.1} parent=0
    _
  %s13 = ssub.s32 1, %s11
  %s14 = scalar_select 0, %s13, %s11
  %v15 = vstv %s9
  %16 = vst [vmem:[#allocation2] sm:$0x1] %v15
  $region1: #{tpu_custom_call.1} parent=0
    #allocation3 [shape = 'u8[4096]{0}', space=vmem, size = 0x1000, scoped, tag = 'input window, operand 0, single buffered']
    #allocation4 [shape = 's32[1]{0}', space=sflag, size = 0x4, scoped, tag = 'scoped memory for tpu_custom_call.1']
    #allocation5 [shape = 'u8[16384]{0}', space=vmem, size = 0x4000, scoped, tag = 'input window, operand 1, single buffered']
    #allocation6 [shape = 's32[1]{0}', space=sflag, size = 0x4, scoped, tag = 'scoped memory for tpu_custom_call.1']
    #allocation7 [shape = 'u8[262144]{0}', space=vmem, size = 0x40000, scoped, tag = 'input window, operand 2, single buffered']
    #allocation8 [shape = 'u8[524288]{0}', space=vmem, size = 0x80000, scoped, tag = 'input window, operand 4, single buffered']
    #allocation9 [shape = 's32[1]{0}', space=sflag, size = 0x4, scoped, tag = 'scoped memory for tpu_custom_call.1']
    #allocation10 [shape = 'u8[524288]{0}', space=vmem, size = 0x80000, scoped, tag = 'input window, operand 6, single buffered']
    %17 = vsyncpa [#allocation4], 0
    %18 = vsyncpa [#allocation6], 0
    %19 = vsyncpa [#allocation9], 0
    // Predicated region
    $region2: #{tpu_custom_call.1} parent=1 // pred_check
      _
    $region3: #{tpu_custom_call.1} parent=1 // pred_check_branch
      %21 = sbr.rel (0) target = $region5
    $region4: #{tpu_custom_call.1} parent=1 // pred_region
      %s23 = ssub.s32 128, 128
      %24 = vsyncadd [#allocation4], %s23
      %s26 = sshll.u32 [#allocation3], 4
      %s27 = int_to_ptr.vmem [resolvable:$true] %s26
      %29 = dma.hbm_to_vmem [thread:$0]  %s0, 128, %s27, [#allocation4]
    $region5: #{tpu_custom_call.1} parent=1 // pred_fallthru
      _
    // Predicated region
    $region6: #{tpu_custom_call.1} parent=1 // pred_check
      _
    $region7: #{tpu_custom_call.1} parent=1 // pred_check_branch
      %31 = sbr.rel (0) target = $region9
    $region8: #{tpu_custom_call.1} parent=1 // pred_region
      %s33 = ssub.s32 512, 512
      %34 = vsyncadd [#allocation6], %s33
      %s36 = sshll.u32 [#allocation5], 4
      %s37 = int_to_ptr.vmem [resolvable:$true] %s36
      %39 = dma.hbm_to_vmem [thread:$0]  %s1, 512, %s37, [#allocation6]
    $region9: #{tpu_custom_call.1} parent=1 // pred_fallthru
      _
    // Predicated region
    $region10: #{tpu_custom_call.1} parent=1 // pred_check
      _
    $region11: #{tpu_custom_call.1} parent=1 // pred_check_branch
      %41 = sbr.rel (0) target = $region13
    $region12: #{tpu_custom_call.1} parent=1 // pred_region
      %s43 = ssub.s32 8192, 8192
      %44 = vsyncadd [#allocation6], %s43
      %s45 = sshll.u32 [#allocation7], 4
      %s46 = int_to_ptr.vmem [resolvable:$true] %s45
      %51 = dma.hbm_to_vmem [thread:$0]  %s2, 8192, %s46, [#allocation6], 256, 256, 16
    $region13: #{tpu_custom_call.1} parent=1 // pred_fallthru
      _
    // Predicated region
    $region14: #{tpu_custom_call.1} parent=1 // pred_check
      _
    $region15: #{tpu_custom_call.1} parent=1 // pred_check_branch
      %53 = sbr.rel (0) target = $region17
    $region16: #{tpu_custom_call.1} parent=1 // pred_region
      _
    $region17: #{tpu_custom_call.1} parent=1 // pred_fallthru
      _
    // Predicated region
    $region18: #{tpu_custom_call.1} parent=1 // pred_check
      _
    $region19: #{tpu_custom_call.1} parent=1 // pred_check_branch
      %55 = sbr.rel (0) target = $region21
    $region20: #{tpu_custom_call.1} parent=1 // pred_region
      %s57 = ssub.s32 16384, 16384
      %58 = vsyncadd [#allocation9], %s57
      %s59 = sshll.u32 [#allocation8], 4
      %s60 = int_to_ptr.vmem [resolvable:$true] %s59
      %65 = dma.hbm_to_vmem [thread:$0]  %s4, 16384, %s60, [#allocation9], 256, 256, 16
    $region21: #{tpu_custom_call.1} parent=1 // pred_fallthru
      _
    // Predicated region
    $region22: #{tpu_custom_call.1} parent=1 // pred_check
      _
    $region23: #{tpu_custom_call.1} parent=1 // pred_check_branch
      %67 = sbr.rel (0) target = $region25
    $region24: #{tpu_custom_call.1} parent=1 // pred_region
      _
    $region25: #{tpu_custom_call.1} parent=1 // pred_fallthru
      _
    // Predicated region
    $region26: #{tpu_custom_call.1} parent=1 // pred_check
      _
    $region27: #{tpu_custom_call.1} parent=1 // pred_check_branch
      %69 = sbr.rel (0) target = $region29
    $region28: #{tpu_custom_call.1} parent=1 // pred_region
      %s71 = ssub.s32 16384, 16384
      %72 = vsyncadd [#allocation9], %s71
      %s73 = sshll.u32 [#allocation10], 4
      %s74 = int_to_ptr.vmem [resolvable:$true] %s73
      %79 = dma.hbm_to_vmem [thread:$0]  %s6, 16384, %s74, [#allocation9], 256, 256, 16
    $region29: #{tpu_custom_call.1} parent=1 // pred_fallthru
      _
    // Predicated region
    $region30: #{tpu_custom_call.1} parent=1 // pred_check
      _
    $region31: #{tpu_custom_call.1} parent=1 // pred_check_branch
      %81 = sbr.rel (0) target = $region33
    $region32: #{tpu_custom_call.1} parent=1 // pred_region
      _
    $region33: #{tpu_custom_call.1} parent=1 // pred_fallthru
      _
    // Predicated region
    $region34: #{tpu_custom_call.1} parent=1 // pred_check
      _
    $region35: #{tpu_custom_call.1} parent=1 // pred_check_branch
      %83 = sbr.rel (0) target = $region37
    $region36: #{tpu_custom_call.1} parent=1 // pred_region
      _
    $region37: #{tpu_custom_call.1} parent=1 // pred_fallthru
      _
    // Predicated region
    $region38: #{tpu_custom_call.1} parent=1 // pred_check
      _
    $region39: #{tpu_custom_call.1} parent=1 // pred_check_branch
      %85 = sbr.rel (0) target = $region41
    $region40: #{tpu_custom_call.1} parent=1 // pred_region
      _
    $region41: #{tpu_custom_call.1} parent=1 // pred_fallthru
      _
    // Predicated region
    $region42: #{tpu_custom_call.1} parent=1 // pred_check
      _
    $region43: #{tpu_custom_call.1} parent=1 // pred_check_branch
      %87 = sbr.rel (0) target = $region45
    $region44: #{tpu_custom_call.1} parent=1 // pred_region
      %88 = dma.done [#allocation4], 128
    $region45: #{tpu_custom_call.1} parent=1 // pred_fallthru
      _
    // Predicated region
    $region46: #{tpu_custom_call.1} parent=1 // pred_check
      _
    $region47: #{tpu_custom_call.1} parent=1 // pred_check_branch
      %90 = sbr.rel (0) target = $region49
    $region48: #{tpu_custom_call.1} parent=1 // pred_region
      %91 = dma.done [#allocation6], 512
    $region49: #{tpu_custom_call.1} parent=1 // pred_fallthru
      _
    // Predicated region
    $region50: #{tpu_custom_call.1} parent=1 // pred_check
      _
    $region51: #{tpu_custom_call.1} parent=1 // pred_check_branch
      %93 = sbr.rel (0) target = $region53
    $region52: #{tpu_custom_call.1} parent=1 // pred_region
      %94 = dma.done [#allocation6], 8192
    $region53: #{tpu_custom_call.1} parent=1 // pred_fallthru
      _
    // Predicated region
    $region54: #{tpu_custom_call.1} parent=1 // pred_check
      _
    $region55: #{tpu_custom_call.1} parent=1 // pred_check_branch
      %96 = sbr.rel (0) target = $region57
    $region56: #{tpu_custom_call.1} parent=1 // pred_region
      %97 = dma.done [#allocation9], 16384
    $region57: #{tpu_custom_call.1} parent=1 // pred_fallthru
      _
    // Predicated region
    $region58: #{tpu_custom_call.1} parent=1 // pred_check
      _
    $region59: #{tpu_custom_call.1} parent=1 // pred_check_branch
      %99 = sbr.rel (0) target = $region61
    $region60: #{tpu_custom_call.1} parent=1 // pred_region
      %100 = dma.done [#allocation9], 16384
    $region61: #{tpu_custom_call.1} parent=1 // pred_fallthru
      _
    %v101 = vld [vmem:[#allocation3] sm:$0xff]
    %v102 = vld [vmem:[#allocation7] sm:$0xff]
    %v103 = vld [vmem:[#allocation7 + $0x8] sm:$0xff]
    %v104 = vld [vmem:[#allocation7 + $0x10] sm:$0xff]
    %v105 = vld [vmem:[#allocation7 + $0x18] sm:$0xff]
    %v106 = vld [vmem:[#allocation7 + $0x20] sm:$0xff]
    %v107 = vld [vmem:[#allocation7 + $0x28] sm:$0xff]
    %v108 = vld [vmem:[#allocation7 + $0x30] sm:$0xff]
    %v109 = vld [vmem:[#allocation7 + $0x38] sm:$0xff]
    %v110 = vld [vmem:[#allocation7 + $0x40] sm:$0xff]
    %v111 = vld [vmem:[#allocation7 + $0x48] sm:$0xff]
    %v112 = vld [vmem:[#allocation7 + $0x50] sm:$0xff]
    %v113 = vld [vmem:[#allocation7 + $0x58] sm:$0xff]
    %v114 = vld [vmem:[#allocation7 + $0x60] sm:$0xff]
    %v115 = vld [vmem:[#allocation7 + $0x68] sm:$0xff]
    %v116 = vld [vmem:[#allocation7 + $0x70] sm:$0xff]
    %v117 = vld [vmem:[#allocation7 + $0x78] sm:$0xff]
    %v118 = vld [vmem:[#allocation7 + $0x80] sm:$0xff]
    %v119 = vld [vmem:[#allocation7 + $0x88] sm:$0xff]
    %v120 = vld [vmem:[#allocation7 + $0x90] sm:$0xff]
    %v121 = vld [vmem:[#allocation7 + $0x98] sm:$0xff]
    %v122 = vld [vmem:[#allocation7 + $0xa0] sm:$0xff]
    %v123 = vld [vmem:[#allocation7 + $0xa8] sm:$0xff]
    %v124 = vld [vmem:[#allocation7 + $0xb0] sm:$0xff]
    %v125 = vld [vmem:[#allocation7 + $0xb8] sm:$0xff]
    %v126 = vld [vmem:[#allocation7 + $0xc0] sm:$0xff]
    %v127 = vld [vmem:[#allocation7 + $0xc8] sm:$0xff]
    %v128 = vld [vmem:[#allocation7 + $0xd0] sm:$0xff]
    %v129 = vld [vmem:[#allocation7 + $0xd8] sm:$0xff]
    %v130 = vld [vmem:[#allocation7 + $0xe0] sm:$0xff]
    %v131 = vld [vmem:[#allocation7 + $0xe8] sm:$0xff]
    %v132 = vld [vmem:[#allocation7 + $0xf0] sm:$0xff]
    %v133 = vld [vmem:[#allocation7 + $0xf8] sm:$0xff]
    %v134 = vld [vmem:[#allocation7 + $0x100] sm:$0xff]
    %v135 = vld [vmem:[#allocation7 + $0x108] sm:$0xff]
    %v136 = vld [vmem:[#allocation7 + $0x110] sm:$0xff]
    %v137 = vld [vmem:[#allocation7 + $0x118] sm:$0xff]
    %v138 = vld [vmem:[#allocation7 + $0x120] sm:$0xff]
    %v139 = vld [vmem:[#allocation7 + $0x128] sm:$0xff]
    %v140 = vld [vmem:[#allocation7 + $0x130] sm:$0xff]
    %v141 = vld [vmem:[#allocation7 + $0x138] sm:$0xff]
    %v142 = vld [vmem:[#allocation7 + $0x140] sm:$0xff]
    %v143 = vld [vmem:[#allocation7 + $0x148] sm:$0xff]
    %v144 = vld [vmem:[#allocation7 + $0x150] sm:$0xff]
    %v145 = vld [vmem:[#allocation7 + $0x158] sm:$0xff]
    %v146 = vld [vmem:[#allocation7 + $0x160] sm:$0xff]
    %v147 = vld [vmem:[#allocation7 + $0x168] sm:$0xff]
    %v148 = vld [vmem:[#allocation7 + $0x170] sm:$0xff]
    %v149 = vld [vmem:[#allocation7 + $0x178] sm:$0xff]
    %v150 = vld [vmem:[#allocation7 + $0x180] sm:$0xff]
    %v151 = vld [vmem:[#allocation7 + $0x188] sm:$0xff]
    %v152 = vld [vmem:[#allocation7 + $0x190] sm:$0xff]
    %v153 = vld [vmem:[#allocation7 + $0x198] sm:$0xff]
    %v154 = vld [vmem:[#allocation7 + $0x1a0] sm:$0xff]
    %v155 = vld [vmem:[#allocation7 + $0x1a8] sm:$0xff]
    %v156 = vld [vmem:[#allocation7 + $0x1b0] sm:$0xff]
    %v157 = vld [vmem:[#allocation7 + $0x1b8] sm:$0xff]
    %v158 = vld [vmem:[#allocation7 + $0x1c0] sm:$0xff]
    %v159 = vld [vmem:[#allocation7 + $0x1c8] sm:$0xff]
    %v160 = vld [vmem:[#allocation7 + $0x1d0] sm:$0xff]
    %v161 = vld [vmem:[#allocation7 + $0x1d8] sm:$0xff]
    %v162 = vld [vmem:[#allocation7 + $0x1e0] sm:$0xff]
    %v163 = vld [vmem:[#allocation7 + $0x1e8] sm:$0xff]
    %v164 = vld [vmem:[#allocation7 + $0x1f0] sm:$0xff]
    %v165 = vld [vmem:[#allocation7 + $0x1f8] sm:$0xff]
    %v166 = vld [vmem:[#allocation5] sm:$0xff]
    %v167 = vld [vmem:[#allocation5 + $0x8] sm:$0xff]
    %v168 = vld [vmem:[#allocation5 + $0x10] sm:$0xff]
    %v169 = vld [vmem:[#allocation5 + $0x18] sm:$0xff]
    %v171 = vunpack.c.l.b16 %v101
    %v172 = vunpack.c.h.b16 %v101
    %v173 = vpack.c.b16 %v171, %v171
    %v174 = vpack.c.b16 %v172, %v172
    %v241 = vunpack.c.l.b16 %v102
    %v242 = vunpack.c.h.b16 %v102
    %v243 = vunpack.c.l.b16 %v103
    %v244 = vunpack.c.h.b16 %v103
    %v245 = vunpack.c.l.b16 %v104
    %v246 = vunpack.c.h.b16 %v104
    %v247 = vunpack.c.l.b16 %v105
    %v248 = vunpack.c.h.b16 %v105
    %v249 = vunpack.c.l.b16 %v106
    %v250 = vunpack.c.h.b16 %v106
    %v251 = vunpack.c.l.b16 %v107
    %v252 = vunpack.c.h.b16 %v107
    %v253 = vunpack.c.l.b16 %v108
    %v254 = vunpack.c.h.b16 %v108
    %v255 = vunpack.c.l.b16 %v109
    %v256 = vunpack.c.h.b16 %v109
    %v257 = vunpack.c.l.b16 %v110
    %v258 = vunpack.c.h.b16 %v110
    %v259 = vunpack.c.l.b16 %v111
    %v260 = vunpack.c.h.b16 %v111
    %v261 = vunpack.c.l.b16 %v112
    %v262 = vunpack.c.h.b16 %v112
    %v263 = vunpack.c.l.b16 %v113
    %v264 = vunpack.c.h.b16 %v113
    %v265 = vunpack.c.l.b16 %v114
    %v266 = vunpack.c.h.b16 %v114
    %v267 = vunpack.c.l.b16 %v115
    %v268 = vunpack.c.h.b16 %v115
    %v269 = vunpack.c.l.b16 %v116
    %v270 = vunpack.c.h.b16 %v116
    %v271 = vunpack.c.l.b16 %v117
    %v272 = vunpack.c.h.b16 %v117
    %v273 = vunpack.c.l.b16 %v118
    %v274 = vunpack.c.h.b16 %v118
    %v275 = vunpack.c.l.b16 %v119
    %v276 = vunpack.c.h.b16 %v119
    %v277 = vunpack.c.l.b16 %v120
    %v278 = vunpack.c.h.b16 %v120
    %v279 = vunpack.c.l.b16 %v121
    %v280 = vunpack.c.h.b16 %v121
    %v281 = vunpack.c.l.b16 %v122
    %v282 = vunpack.c.h.b16 %v122
    %v283 = vunpack.c.l.b16 %v123
    %v284 = vunpack.c.h.b16 %v123
    %v285 = vunpack.c.l.b16 %v124
    %v286 = vunpack.c.h.b16 %v124
    %v287 = vunpack.c.l.b16 %v125
    %v288 = vunpack.c.h.b16 %v125
    %v289 = vunpack.c.l.b16 %v126
    %v290 = vunpack.c.h.b16 %v126
    %v291 = vunpack.c.l.b16 %v127
    %v292 = vunpack.c.h.b16 %v127
    %v293 = vunpack.c.l.b16 %v128
    %v294 = vunpack.c.h.b16 %v128
    %v295 = vunpack.c.l.b16 %v129
    %v296 = vunpack.c.h.b16 %v129
    %v297 = vunpack.c.l.b16 %v130
    %v298 = vunpack.c.h.b16 %v130
    %v299 = vunpack.c.l.b16 %v131
    %v300 = vunpack.c.h.b16 %v131
    %v301 = vunpack.c.l.b16 %v132
    %v302 = vunpack.c.h.b16 %v132
    %v303 = vunpack.c.l.b16 %v133
    %v304 = vunpack.c.h.b16 %v133
    %v305 = vunpack.c.l.b16 %v134
    %v306 = vunpack.c.h.b16 %v134
    %v307 = vunpack.c.l.b16 %v135
    %v308 = vunpack.c.h.b16 %v135
    %v309 = vunpack.c.l.b16 %v136
    %v310 = vunpack.c.h.b16 %v136
    %v311 = vunpack.c.l.b16 %v137
    %v312 = vunpack.c.h.b16 %v137
    %v313 = vunpack.c.l.b16 %v138
    %v314 = vunpack.c.h.b16 %v138
    %v315 = vunpack.c.l.b16 %v139
    %v316 = vunpack.c.h.b16 %v139
    %v317 = vunpack.c.l.b16 %v140
    %v318 = vunpack.c.h.b16 %v140
    %v319 = vunpack.c.l.b16 %v141
    %v320 = vunpack.c.h.b16 %v141
    %v321 = vunpack.c.l.b16 %v142
    %v322 = vunpack.c.h.b16 %v142
    %v323 = vunpack.c.l.b16 %v143
    %v324 = vunpack.c.h.b16 %v143
    %v325 = vunpack.c.l.b16 %v144
    %v326 = vunpack.c.h.b16 %v144
    %v327 = vunpack.c.l.b16 %v145
    %v328 = vunpack.c.h.b16 %v145
    %v329 = vunpack.c.l.b16 %v146
    %v330 = vunpack.c.h.b16 %v146
    %v331 = vunpack.c.l.b16 %v147
    %v332 = vunpack.c.h.b16 %v147
    %v333 = vunpack.c.l.b16 %v148
    %v334 = vunpack.c.h.b16 %v148
    %v335 = vunpack.c.l.b16 %v149
    %v336 = vunpack.c.h.b16 %v149
    %v337 = vunpack.c.l.b16 %v150
    %v338 = vunpack.c.h.b16 %v150
    %v339 = vunpack.c.l.b16 %v151
    %v340 = vunpack.c.h.b16 %v151
    %v341 = vunpack.c.l.b16 %v152
    %v342 = vunpack.c.h.b16 %v152
    %v343 = vunpack.c.l.b16 %v153
    %v344 = vunpack.c.h.b16 %v153
    %v345 = vunpack.c.l.b16 %v154
    %v346 = vunpack.c.h.b16 %v154
    %v347 = vunpack.c.l.b16 %v155
    %v348 = vunpack.c.h.b16 %v155
    %v349 = vunpack.c.l.b16 %v156
    %v350 = vunpack.c.h.b16 %v156
    %v351 = vunpack.c.l.b16 %v157
    %v352 = vunpack.c.h.b16 %v157
    %v353 = vunpack.c.l.b16 %v158
    %v354 = vunpack.c.h.b16 %v158
    %v355 = vunpack.c.l.b16 %v159
    %v356 = vunpack.c.h.b16 %v159
    %v357 = vunpack.c.l.b16 %v160
    %v358 = vunpack.c.h.b16 %v160
    %v359 = vunpack.c.l.b16 %v161
    %v360 = vunpack.c.h.b16 %v161
    %v361 = vunpack.c.l.b16 %v162
    %v362 = vunpack.c.h.b16 %v162
    %v363 = vunpack.c.l.b16 %v163
    %v364 = vunpack.c.h.b16 %v163
    %v365 = vunpack.c.l.b16 %v164
    %v366 = vunpack.c.h.b16 %v164
    %v367 = vunpack.c.l.b16 %v165
    %v368 = vunpack.c.h.b16 %v165
    %v369 = vpack.c.b16 %v245, %v241
    %v370 = vpack.c.b16 %v246, %v242
    %v371 = vpack.c.b16 %v247, %v243
    %v372 = vpack.c.b16 %v248, %v244
    %v373 = vpack.c.b16 %v253, %v249
    %v374 = vpack.c.b16 %v254, %v250
    %v375 = vpack.c.b16 %v255, %v251
    %v376 = vpack.c.b16 %v256, %v252
    %v377 = vpack.c.b16 %v261, %v257
    %v378 = vpack.c.b16 %v262, %v258
    %v379 = vpack.c.b16 %v263, %v259
    %v380 = vpack.c.b16 %v264, %v260
    %v381 = vpack.c.b16 %v269, %v265
    %v382 = vpack.c.b16 %v270, %v266
    %v383 = vpack.c.b16 %v271, %v267
    %v384 = vpack.c.b16 %v272, %v268
    %v385 = vpack.c.b16 %v277, %v273
    %v386 = vpack.c.b16 %v278, %v274
    %v387 = vpack.c.b16 %v279, %v275
    %v388 = vpack.c.b16 %v280, %v276
    %v389 = vpack.c.b16 %v285, %v281
    %v390 = vpack.c.b16 %v286, %v282
    %v391 = vpack.c.b16 %v287, %v283
    %v392 = vpack.c.b16 %v288, %v284
    %v393 = vpack.c.b16 %v293, %v289
    %v394 = vpack.c.b16 %v294, %v290
    %v395 = vpack.c.b16 %v295, %v291
    %v396 = vpack.c.b16 %v296, %v292
    %v397 = vpack.c.b16 %v301, %v297
    %v398 = vpack.c.b16 %v302, %v298
    %v399 = vpack.c.b16 %v303, %v299
    %v400 = vpack.c.b16 %v304, %v300
    %v401 = vpack.c.b16 %v309, %v305
    %v402 = vpack.c.b16 %v310, %v306
    %v403 = vpack.c.b16 %v311, %v307
    %v404 = vpack.c.b16 %v312, %v308
    %v405 = vpack.c.b16 %v317, %v313
    %v406 = vpack.c.b16 %v318, %v314
    %v407 = vpack.c.b16 %v319, %v315
    %v408 = vpack.c.b16 %v320, %v316
    %v409 = vpack.c.b16 %v325, %v321
    %v410 = vpack.c.b16 %v326, %v322
    %v411 = vpack.c.b16 %v327, %v323
    %v412 = vpack.c.b16 %v328, %v324
    %v413 = vpack.c.b16 %v333, %v329
    %v414 = vpack.c.b16 %v334, %v330
    %v415 = vpack.c.b16 %v335, %v331
    %v416 = vpack.c.b16 %v336, %v332
    %v417 = vpack.c.b16 %v341, %v337
    %v418 = vpack.c.b16 %v342, %v338
    %v419 = vpack.c.b16 %v343, %v339
    %v420 = vpack.c.b16 %v344, %v340
    %v421 = vpack.c.b16 %v349, %v345
    %v422 = vpack.c.b16 %v350, %v346
    %v423 = vpack.c.b16 %v351, %v347
    %v424 = vpack.c.b16 %v352, %v348
    %v425 = vpack.c.b16 %v357, %v353
    %v426 = vpack.c.b16 %v358, %v354
    %v427 = vpack.c.b16 %v359, %v355
    %v428 = vpack.c.b16 %v360, %v356
    %v429 = vpack.c.b16 %v365, %v361
    %v430 = vpack.c.b16 %v366, %v362
    %v431 = vpack.c.b16 %v367, %v363
    %v432 = vpack.c.b16 %v368, %v364
    %497 = vmatprep.subr.bf16.mxu0 %v370
    %498 = vmatpush1.bf16.msra.mxu0 %v369
    %499 = vmatprep.subr.bf16.mxu0 %v374
    %500 = vmatpush1.bf16.msra.mxu0 %v373
    %501 = vmatprep.subr.bf16.mxu0 %v378
    %502 = vmatpush1.bf16.msra.mxu0 %v377
    %503 = vmatprep.subr.bf16.mxu0 %v382
    %504 = vmatpush1.bf16.msra.mxu0 %v381
    %505 = vmatprep.subr.bf16.mxu0 %v386
    %506 = vmatpush1.bf16.msra.mxu0 %v385
    %507 = vmatprep.subr.bf16.mxu0 %v390
    %508 = vmatpush1.bf16.msra.mxu0 %v389
    %509 = vmatprep.subr.bf16.mxu0 %v394
    %510 = vmatpush1.bf16.msra.mxu0 %v393
    %511 = vmatprep.subr.bf16.mxu0 %v398
    %512 = vmatpush1.bf16.msra.mxu0 %v397
    %513 = vmatprep.subr.bf16.mxu0 %v402
    %514 = vmatpush1.bf16.msra.mxu0 %v401
    %515 = vmatprep.subr.bf16.mxu0 %v406
    %516 = vmatpush1.bf16.msra.mxu0 %v405
    %517 = vmatprep.subr.bf16.mxu0 %v410
    %518 = vmatpush1.bf16.msra.mxu0 %v409
    %519 = vmatprep.subr.bf16.mxu0 %v414
    %520 = vmatpush1.bf16.msra.mxu0 %v413
    %521 = vmatprep.subr.bf16.mxu0 %v418
    %522 = vmatpush1.bf16.msra.mxu0 %v417
    %523 = vmatprep.subr.bf16.mxu0 %v422
    %524 = vmatpush1.bf16.msra.mxu0 %v421
    %525 = vmatprep.subr.bf16.mxu0 %v426
    %526 = vmatpush1.bf16.msra.mxu0 %v425
    %527 = vmatprep.subr.bf16.mxu0 %v430
    %528 = vmatpush1.bf16.msra.mxu0 %v429
    %529 = vmatprep.mubr.bf16.mxu0 %v174
    %530 = vmatmul.mubr.bf16.gmra.mrb[0].mxu0 %v173
    %v531 = vpop.f32.mrb[0].mxu0
    %v532 = vadd.f32 %v166, %v531
    %v533 = vpop.f32.mrb[0].mxu0
    %v534 = vadd.f32 %v167, %v533
    %v535 = vpop.f32.mrb[0].mxu0
    %v536 = vpop.f32.mrb[0].mxu0
    %537 = vdwg.mxu0
    %538 = vmatprep.subr.bf16.mxu0 %v372
    %539 = vmatpush1.bf16.msra.mxu0 %v371
    %540 = vmatprep.subr.bf16.mxu0 %v376
    %541 = vmatpush1.bf16.msra.mxu0 %v375
    %542 = vmatprep.subr.bf16.mxu0 %v380
    %543 = vmatpush1.bf16.msra.mxu0 %v379
    %544 = vmatprep.subr.bf16.mxu0 %v384
    %545 = vmatpush1.bf16.msra.mxu0 %v383
    %546 = vmatprep.subr.bf16.mxu0 %v388
    %547 = vmatpush1.bf16.msra.mxu0 %v387
    %548 = vmatprep.subr.bf16.mxu0 %v392
    %549 = vmatpush1.bf16.msra.mxu0 %v391
    %550 = vmatprep.subr.bf16.mxu0 %v396
    %551 = vmatpush1.bf16.msra.mxu0 %v395
    %552 = vmatprep.subr.bf16.mxu0 %v400
    %553 = vmatpush1.bf16.msra.mxu0 %v399
    %554 = vmatprep.subr.bf16.mxu0 %v404
    %555 = vmatpush1.bf16.msra.mxu0 %v403
    %556 = vmatprep.subr.bf16.mxu0 %v408
    %557 = vmatpush1.bf16.msra.mxu0 %v407
    %558 = vmatprep.subr.bf16.mxu0 %v412
    %559 = vmatpush1.bf16.msra.mxu0 %v411
    %560 = vmatprep.subr.bf16.mxu0 %v416
    %561 = vmatpush1.bf16.msra.mxu0 %v415
    %562 = vmatprep.subr.bf16.mxu0 %v420
    %563 = vmatpush1.bf16.msra.mxu0 %v419
    %564 = vmatprep.subr.bf16.mxu0 %v424
    %565 = vmatpush1.bf16.msra.mxu0 %v423
    %566 = vmatprep.subr.bf16.mxu0 %v428
    %567 = vmatpush1.bf16.msra.mxu0 %v427
    %568 = vmatprep.subr.bf16.mxu0 %v432
    %569 = vmatpush1.bf16.msra.mxu0 %v431
    %570 = vmatprep.mubr.bf16.mxu0 %v174
    %571 = vmatmul.mubr.bf16.gmra.mrb[0].mxu0 %v173
    %v572 = vpop.f32.mrb[0].mxu0
    %v573 = vadd.f32 %v168, %v572
    %v574 = vpop.f32.mrb[0].mxu0
    %v575 = vadd.f32 %v169, %v574
    %v576 = vpop.f32.mrb[0].mxu0
    %v577 = vpop.f32.mrb[0].mxu0
    %578 = vdwg.mxu0
    %v579 = vld [vmem:[%s3] sm:$0xf]
    %v581 = vlaneseq
    %v582 = vshrl.u32 %v581, 7
    %v583 = vsub.s32 0, %v582
    %v584 = vrot.slane %v579, %v583
    %v585 = vlaneseq
    %v586 = vshrl.u32 %v585, 7
    %v587 = vsub.s32 1, %v586
    %v588 = vrot.slane %v579, %v587
    %v589 = vlaneseq
    %v590 = vshrl.u32 %v589, 7
    %v591 = vsub.s32 2, %v590
    %v592 = vrot.slane %v579, %v591
    %v593 = vlaneseq
    %v594 = vshrl.u32 %v593, 7
    %v595 = vsub.s32 3, %v594
    %v596 = vrot.slane %v579, %v595
    %v601 = vadd.f32 %v532, %v584
    %v602 = vadd.f32 %v534, %v588
    %v603 = vadd.f32 %v573, %v592
    %v604 = vadd.f32 %v575, %v596
    %vm605 = vcmp.ge.f32.partialorder %v601, 0.0
    %vm606 = vcmp.ge.f32.partialorder %v602, 0.0
    %vm607 = vcmp.ge.f32.partialorder %v603, 0.0
    %vm608 = vcmp.ge.f32.partialorder %v604, 0.0
    %v609 = vmul.f32 %v601, 0.2
    %v610 = vmul.f32 %v602, 0.2
    %v611 = vmul.f32 %v603, 0.2
    %v612 = vmul.f32 %v604, 0.2
    %v613 = vsel %vm605, %v601, %v609
    %v614 = vsel %vm606, %v602, %v610
    %v615 = vsel %vm607, %v603, %v611
    %v616 = vsel %vm608, %v604, %v612
    %v617 = vpack.c.bf16 %v613, %v613
    %v618 = vpack.c.bf16 %v614, %v614
    %v619 = vpack.c.bf16 %v615, %v615
    %v620 = vpack.c.bf16 %v616, %v616
    %v621 = vld [vmem:[#allocation8] sm:$0xff]
    %v622 = vld [vmem:[#allocation8 + $0x8] sm:$0xff]
    %v623 = vld [vmem:[#allocation8 + $0x10] sm:$0xff]
    %v624 = vld [vmem:[#allocation8 + $0x18] sm:$0xff]
    %v625 = vld [vmem:[#allocation8 + $0x20] sm:$0xff]
    %v626 = vld [vmem:[#allocation8 + $0x28] sm:$0xff]
    %v627 = vld [vmem:[#allocation8 + $0x30] sm:$0xff]
    %v628 = vld [vmem:[#allocation8 + $0x38] sm:$0xff]
    %v629 = vld [vmem:[#allocation8 + $0x40] sm:$0xff]
    %v630 = vld [vmem:[#allocation8 + $0x48] sm:$0xff]
    %v631 = vld [vmem:[#allocation8 + $0x50] sm:$0xff]
    %v632 = vld [vmem:[#allocation8 + $0x58] sm:$0xff]
    %v633 = vld [vmem:[#allocation8 + $0x60] sm:$0xff]
    %v634 = vld [vmem:[#allocation8 + $0x68] sm:$0xff]
    %v635 = vld [vmem:[#allocation8 + $0x70] sm:$0xff]
    %v636 = vld [vmem:[#allocation8 + $0x78] sm:$0xff]
    %v637 = vld [vmem:[#allocation8 + $0x80] sm:$0xff]
    %v638 = vld [vmem:[#allocation8 + $0x88] sm:$0xff]
    %v639 = vld [vmem:[#allocation8 + $0x90] sm:$0xff]
    %v640 = vld [vmem:[#allocation8 + $0x98] sm:$0xff]
    %v641 = vld [vmem:[#allocation8 + $0xa0] sm:$0xff]
    %v642 = vld [vmem:[#allocation8 + $0xa8] sm:$0xff]
    %v643 = vld [vmem:[#allocation8 + $0xb0] sm:$0xff]
    %v644 = vld [vmem:[#allocation8 + $0xb8] sm:$0xff]
    %v645 = vld [vmem:[#allocation8 + $0xc0] sm:$0xff]
    %v646 = vld [vmem:[#allocation8 + $0xc8] sm:$0xff]
    %v647 = vld [vmem:[#allocation8 + $0xd0] sm:$0xff]
    %v648 = vld [vmem:[#allocation8 + $0xd8] sm:$0xff]
    %v649 = vld [vmem:[#allocation8 + $0xe0] sm:$0xff]
    %v650 = vld [vmem:[#allocation8 + $0xe8] sm:$0xff]
    %v651 = vld [vmem:[#allocation8 + $0xf0] sm:$0xff]
    %v652 = vld [vmem:[#allocation8 + $0xf8] sm:$0xff]
    %v653 = vld [vmem:[#allocation8 + $0x100] sm:$0xff]
    %v654 = vld [vmem:[#allocation8 + $0x108] sm:$0xff]
    %v655 = vld [vmem:[#allocation8 + $0x110] sm:$0xff]
    %v656 = vld [vmem:[#allocation8 + $0x118] sm:$0xff]
    %v657 = vld [vmem:[#allocation8 + $0x120] sm:$0xff]
    %v658 = vld [vmem:[#allocation8 + $0x128] sm:$0xff]
    %v659 = vld [vmem:[#allocation8 + $0x130] sm:$0xff]
    %v660 = vld [vmem:[#allocation8 + $0x138] sm:$0xff]
    %v661 = vld [vmem:[#allocation8 + $0x140] sm:$0xff]
    %v662 = vld [vmem:[#allocation8 + $0x148] sm:$0xff]
    %v663 = vld [vmem:[#allocation8 + $0x150] sm:$0xff]
    %v664 = vld [vmem:[#allocation8 + $0x158] sm:$0xff]
    %v665 = vld [vmem:[#allocation8 + $0x160] sm:$0xff]
    %v666 = vld [vmem:[#allocation8 + $0x168] sm:$0xff]
    %v667 = vld [vmem:[#allocation8 + $0x170] sm:$0xff]
    %v668 = vld [vmem:[#allocation8 + $0x178] sm:$0xff]
    %v669 = vld [vmem:[#allocation8 + $0x180] sm:$0xff]
    %v670 = vld [vmem:[#allocation8 + $0x188] sm:$0xff]
    %v671 = vld [vmem:[#allocation8 + $0x190] sm:$0xff]
    %v672 = vld [vmem:[#allocation8 + $0x198] sm:$0xff]
    %v673 = vld [vmem:[#allocation8 + $0x1a0] sm:$0xff]
    %v674 = vld [vmem:[#allocation8 + $0x1a8] sm:$0xff]
    %v675 = vld [vmem:[#allocation8 + $0x1b0] sm:$0xff]
    %v676 = vld [vmem:[#allocation8 + $0x1b8] sm:$0xff]
    %v677 = vld [vmem:[#allocation8 + $0x1c0] sm:$0xff]
    %v678 = vld [vmem:[#allocation8 + $0x1c8] sm:$0xff]
    %v679 = vld [vmem:[#allocation8 + $0x1d0] sm:$0xff]
    %v680 = vld [vmem:[#allocation8 + $0x1d8] sm:$0xff]
    %v681 = vld [vmem:[#allocation8 + $0x1e0] sm:$0xff]
    %v682 = vld [vmem:[#allocation8 + $0x1e8] sm:$0xff]
    %v683 = vld [vmem:[#allocation8 + $0x1f0] sm:$0xff]
    %v684 = vld [vmem:[#allocation8 + $0x1f8] sm:$0xff]
    %v685 = vld [vmem:[#allocation8 + $0x200] sm:$0xff]
    %v686 = vld [vmem:[#allocation8 + $0x208] sm:$0xff]
    %v687 = vld [vmem:[#allocation8 + $0x210] sm:$0xff]
    %v688 = vld [vmem:[#allocation8 + $0x218] sm:$0xff]
    %v689 = vld [vmem:[#allocation8 + $0x220] sm:$0xff]
    %v690 = vld [vmem:[#allocation8 + $0x228] sm:$0xff]
    %v691 = vld [vmem:[#allocation8 + $0x230] sm:$0xff]
    %v692 = vld [vmem:[#allocation8 + $0x238] sm:$0xff]
    %v693 = vld [vmem:[#allocation8 + $0x240] sm:$0xff]
    %v694 = vld [vmem:[#allocation8 + $0x248] sm:$0xff]
    %v695 = vld [vmem:[#allocation8 + $0x250] sm:$0xff]
    %v696 = vld [vmem:[#allocation8 + $0x258] sm:$0xff]
    %v697 = vld [vmem:[#allocation8 + $0x260] sm:$0xff]
    %v698 = vld [vmem:[#allocation8 + $0x268] sm:$0xff]
    %v699 = vld [vmem:[#allocation8 + $0x270] sm:$0xff]
    %v700 = vld [vmem:[#allocation8 + $0x278] sm:$0xff]
    %v701 = vld [vmem:[#allocation8 + $0x280] sm:$0xff]
    %v702 = vld [vmem:[#allocation8 + $0x288] sm:$0xff]
    %v703 = vld [vmem:[#allocation8 + $0x290] sm:$0xff]
    %v704 = vld [vmem:[#allocation8 + $0x298] sm:$0xff]
    %v705 = vld [vmem:[#allocation8 + $0x2a0] sm:$0xff]
    %v706 = vld [vmem:[#allocation8 + $0x2a8] sm:$0xff]
    %v707 = vld [vmem:[#allocation8 + $0x2b0] sm:$0xff]
    %v708 = vld [vmem:[#allocation8 + $0x2b8] sm:$0xff]
    %v709 = vld [vmem:[#allocation8 + $0x2c0] sm:$0xff]
    %v710 = vld [vmem:[#allocation8 + $0x2c8] sm:$0xff]
    %v711 = vld [vmem:[#allocation8 + $0x2d0] sm:$0xff]
    %v712 = vld [vmem:[#allocation8 + $0x2d8] sm:$0xff]
    %v713 = vld [vmem:[#allocation8 + $0x2e0] sm:$0xff]
    %v714 = vld [vmem:[#allocation8 + $0x2e8] sm:$0xff]
    %v715 = vld [vmem:[#allocation8 + $0x2f0] sm:$0xff]
    %v716 = vld [vmem:[#allocation8 + $0x2f8] sm:$0xff]
    %v717 = vld [vmem:[#allocation8 + $0x300] sm:$0xff]
    %v718 = vld [vmem:[#allocation8 + $0x308] sm:$0xff]
    %v719 = vld [vmem:[#allocation8 + $0x310] sm:$0xff]
    %v720 = vld [vmem:[#allocation8 + $0x318] sm:$0xff]
    %v721 = vld [vmem:[#allocation8 + $0x320] sm:$0xff]
    %v722 = vld [vmem:[#allocation8 + $0x328] sm:$0xff]
    %v723 = vld [vmem:[#allocation8 + $0x330] sm:$0xff]
    %v724 = vld [vmem:[#allocation8 + $0x338] sm:$0xff]
    %v725 = vld [vmem:[#allocation8 + $0x340] sm:$0xff]
    %v726 = vld [vmem:[#allocation8 + $0x348] sm:$0xff]
    %v727 = vld [vmem:[#allocation8 + $0x350] sm:$0xff]
    %v728 = vld [vmem:[#allocation8 + $0x358] sm:$0xff]
    %v729 = vld [vmem:[#allocation8 + $0x360] sm:$0xff]
    %v730 = vld [vmem:[#allocation8 + $0x368] sm:$0xff]
    %v731 = vld [vmem:[#allocation8 + $0x370] sm:$0xff]
    %v732 = vld [vmem:[#allocation8 + $0x378] sm:$0xff]
    %v733 = vld [vmem:[#allocation8 + $0x380] sm:$0xff]
    %v734 = vld [vmem:[#allocation8 + $0x388] sm:$0xff]
    %v735 = vld [vmem:[#allocation8 + $0x390] sm:$0xff]
    %v736 = vld [vmem:[#allocation8 + $0x398] sm:$0xff]
    %v737 = vld [vmem:[#allocation8 + $0x3a0] sm:$0xff]
    %v738 = vld [vmem:[#allocation8 + $0x3a8] sm:$0xff]
    %v739 = vld [vmem:[#allocation8 + $0x3b0] sm:$0xff]
    %v740 = vld [vmem:[#allocation8 + $0x3b8] sm:$0xff]
    %v741 = vld [vmem:[#allocation8 + $0x3c0] sm:$0xff]
    %v742 = vld [vmem:[#allocation8 + $0x3c8] sm:$0xff]
    %v743 = vld [vmem:[#allocation8 + $0x3d0] sm:$0xff]
    %v744 = vld [vmem:[#allocation8 + $0x3d8] sm:$0xff]
    %v745 = vld [vmem:[#allocation8 + $0x3e0] sm:$0xff]
    %v746 = vld [vmem:[#allocation8 + $0x3e8] sm:$0xff]
    %v747 = vld [vmem:[#allocation8 + $0x3f0] sm:$0xff]
    %v748 = vld [vmem:[#allocation8 + $0x3f8] sm:$0xff]
    %v749 = vld [vmem:[%s5] sm:$0xf]
    %v751 = vlaneseq
    %v752 = vshrl.u32 %v751, 7
    %v753 = vsub.s32 0, %v752
    %v754 = vrot.slane %v749, %v753
    %v755 = vlaneseq
    %v756 = vshrl.u32 %v755, 7
    %v757 = vsub.s32 1, %v756
    %v758 = vrot.slane %v749, %v757
    %v759 = vlaneseq
    %v760 = vshrl.u32 %v759, 7
    %v761 = vsub.s32 2, %v760
    %v762 = vrot.slane %v749, %v761
    %v763 = vlaneseq
    %v764 = vshrl.u32 %v763, 7
    %v765 = vsub.s32 3, %v764
    %v766 = vrot.slane %v749, %v765
    %v899 = vunpack.c.l.b16 %v621
    %v900 = vunpack.c.h.b16 %v621
    %v901 = vunpack.c.l.b16 %v622
    %v902 = vunpack.c.h.b16 %v622
    %v903 = vunpack.c.l.b16 %v623
    %v904 = vunpack.c.h.b16 %v623
    %v905 = vunpack.c.l.b16 %v624
    %v906 = vunpack.c.h.b16 %v624
    %v907 = vunpack.c.l.b16 %v625
    %v908 = vunpack.c.h.b16 %v625
    %v909 = vunpack.c.l.b16 %v626
    %v910 = vunpack.c.h.b16 %v626
    %v911 = vunpack.c.l.b16 %v627
    %v912 = vunpack.c.h.b16 %v627
    %v913 = vunpack.c.l.b16 %v628
    %v914 = vunpack.c.h.b16 %v628
    %v915 = vunpack.c.l.b16 %v629
    %v916 = vunpack.c.h.b16 %v629
    %v917 = vunpack.c.l.b16 %v630
    %v918 = vunpack.c.h.b16 %v630
    %v919 = vunpack.c.l.b16 %v631
    %v920 = vunpack.c.h.b16 %v631
    %v921 = vunpack.c.l.b16 %v632
    %v922 = vunpack.c.h.b16 %v632
    %v923 = vunpack.c.l.b16 %v633
    %v924 = vunpack.c.h.b16 %v633
    %v925 = vunpack.c.l.b16 %v634
    %v926 = vunpack.c.h.b16 %v634
    %v927 = vunpack.c.l.b16 %v635
    %v928 = vunpack.c.h.b16 %v635
    %v929 = vunpack.c.l.b16 %v636
    %v930 = vunpack.c.h.b16 %v636
    %v931 = vunpack.c.l.b16 %v637
    %v932 = vunpack.c.h.b16 %v637
    %v933 = vunpack.c.l.b16 %v638
    %v934 = vunpack.c.h.b16 %v638
    %v935 = vunpack.c.l.b16 %v639
    %v936 = vunpack.c.h.b16 %v639
    %v937 = vunpack.c.l.b16 %v640
    %v938 = vunpack.c.h.b16 %v640
    %v939 = vunpack.c.l.b16 %v641
    %v940 = vunpack.c.h.b16 %v641
    %v941 = vunpack.c.l.b16 %v642
    %v942 = vunpack.c.h.b16 %v642
    %v943 = vunpack.c.l.b16 %v643
    %v944 = vunpack.c.h.b16 %v643
    %v945 = vunpack.c.l.b16 %v644
    %v946 = vunpack.c.h.b16 %v644
    %v947 = vunpack.c.l.b16 %v645
    %v948 = vunpack.c.h.b16 %v645
    %v949 = vunpack.c.l.b16 %v646
    %v950 = vunpack.c.h.b16 %v646
    %v951 = vunpack.c.l.b16 %v647
    %v952 = vunpack.c.h.b16 %v647
    %v953 = vunpack.c.l.b16 %v648
    %v954 = vunpack.c.h.b16 %v648
    %v955 = vunpack.c.l.b16 %v649
    %v956 = vunpack.c.h.b16 %v649
    %v957 = vunpack.c.l.b16 %v650
    %v958 = vunpack.c.h.b16 %v650
    %v959 = vunpack.c.l.b16 %v651
    %v960 = vunpack.c.h.b16 %v651
    %v961 = vunpack.c.l.b16 %v652
    %v962 = vunpack.c.h.b16 %v652
    %v963 = vunpack.c.l.b16 %v653
    %v964 = vunpack.c.h.b16 %v653
    %v965 = vunpack.c.l.b16 %v654
    %v966 = vunpack.c.h.b16 %v654
    %v967 = vunpack.c.l.b16 %v655
    %v968 = vunpack.c.h.b16 %v655
    %v969 = vunpack.c.l.b16 %v656
    %v970 = vunpack.c.h.b16 %v656
    %v971 = vunpack.c.l.b16 %v657
    %v972 = vunpack.c.h.b16 %v657
    %v973 = vunpack.c.l.b16 %v658
    %v974 = vunpack.c.h.b16 %v658
    %v975 = vunpack.c.l.b16 %v659
    %v976 = vunpack.c.h.b16 %v659
    %v977 = vunpack.c.l.b16 %v660
    %v978 = vunpack.c.h.b16 %v660
    %v979 = vunpack.c.l.b16 %v661
    %v980 = vunpack.c.h.b16 %v661
    %v981 = vunpack.c.l.b16 %v662
    %v982 = vunpack.c.h.b16 %v662
    %v983 = vunpack.c.l.b16 %v663
    %v984 = vunpack.c.h.b16 %v663
    %v985 = vunpack.c.l.b16 %v664
    %v986 = vunpack.c.h.b16 %v664
    %v987 = vunpack.c.l.b16 %v665
    %v988 = vunpack.c.h.b16 %v665
    %v989 = vunpack.c.l.b16 %v666
    %v990 = vunpack.c.h.b16 %v666
    %v991 = vunpack.c.l.b16 %v667
    %v992 = vunpack.c.h.b16 %v667
    %v993 = vunpack.c.l.b16 %v668
    %v994 = vunpack.c.h.b16 %v668
    %v995 = vunpack.c.l.b16 %v669
    %v996 = vunpack.c.h.b16 %v669
    %v997 = vunpack.c.l.b16 %v670
    %v998 = vunpack.c.h.b16 %v670
    %v999 = vunpack.c.l.b16 %v671
    %v1000 = vunpack.c.h.b16 %v671
    %v1001 = vunpack.c.l.b16 %v672
    %v1002 = vunpack.c.h.b16 %v672
    %v1003 = vunpack.c.l.b16 %v673
    %v1004 = vunpack.c.h.b16 %v673
    %v1005 = vunpack.c.l.b16 %v674
    %v1006 = vunpack.c.h.b16 %v674
    %v1007 = vunpack.c.l.b16 %v675
    %v1008 = vunpack.c.h.b16 %v675
    %v1009 = vunpack.c.l.b16 %v676
    %v1010 = vunpack.c.h.b16 %v676
    %v1011 = vunpack.c.l.b16 %v677
    %v1012 = vunpack.c.h.b16 %v677
    %v1013 = vunpack.c.l.b16 %v678
    %v1014 = vunpack.c.h.b16 %v678
    %v1015 = vunpack.c.l.b16 %v679
    %v1016 = vunpack.c.h.b16 %v679
    %v1017 = vunpack.c.l.b16 %v680
    %v1018 = vunpack.c.h.b16 %v680
    %v1019 = vunpack.c.l.b16 %v681
    %v1020 = vunpack.c.h.b16 %v681
    %v1021 = vunpack.c.l.b16 %v682
    %v1022 = vunpack.c.h.b16 %v682
    %v1023 = vunpack.c.l.b16 %v683
    %v1024 = vunpack.c.h.b16 %v683
    %v1025 = vunpack.c.l.b16 %v684
    %v1026 = vunpack.c.h.b16 %v684
    %v1027 = vunpack.c.l.b16 %v685
    %v1028 = vunpack.c.h.b16 %v685
    %v1029 = vunpack.c.l.b16 %v686
    %v1030 = vunpack.c.h.b16 %v686
    %v1031 = vunpack.c.l.b16 %v687
    %v1032 = vunpack.c.h.b16 %v687
    %v1033 = vunpack.c.l.b16 %v688
    %v1034 = vunpack.c.h.b16 %v688
    %v1035 = vunpack.c.l.b16 %v689
    %v1036 = vunpack.c.h.b16 %v689
    %v1037 = vunpack.c.l.b16 %v690
    %v1038 = vunpack.c.h.b16 %v690
    %v1039 = vunpack.c.l.b16 %v691
    %v1040 = vunpack.c.h.b16 %v691
    %v1041 = vunpack.c.l.b16 %v692
    %v1042 = vunpack.c.h.b16 %v692
    %v1043 = vunpack.c.l.b16 %v693
    %v1044 = vunpack.c.h.b16 %v693
    %v1045 = vunpack.c.l.b16 %v694
    %v1046 = vunpack.c.h.b16 %v694
    %v1047 = vunpack.c.l.b16 %v695
    %v1048 = vunpack.c.h.b16 %v695
    %v1049 = vunpack.c.l.b16 %v696
    %v1050 = vunpack.c.h.b16 %v696
    %v1051 = vunpack.c.l.b16 %v697
    %v1052 = vunpack.c.h.b16 %v697
    %v1053 = vunpack.c.l.b16 %v698
    %v1054 = vunpack.c.h.b16 %v698
    %v1055 = vunpack.c.l.b16 %v699
    %v1056 = vunpack.c.h.b16 %v699
    %v1057 = vunpack.c.l.b16 %v700
    %v1058 = vunpack.c.h.b16 %v700
    %v1059 = vunpack.c.l.b16 %v701
    %v1060 = vunpack.c.h.b16 %v701
    %v1061 = vunpack.c.l.b16 %v702
    %v1062 = vunpack.c.h.b16 %v702
    %v1063 = vunpack.c.l.b16 %v703
    %v1064 = vunpack.c.h.b16 %v703
    %v1065 = vunpack.c.l.b16 %v704
    %v1066 = vunpack.c.h.b16 %v704
    %v1067 = vunpack.c.l.b16 %v705
    %v1068 = vunpack.c.h.b16 %v705
    %v1069 = vunpack.c.l.b16 %v706
    %v1070 = vunpack.c.h.b16 %v706
    %v1071 = vunpack.c.l.b16 %v707
    %v1072 = vunpack.c.h.b16 %v707
    %v1073 = vunpack.c.l.b16 %v708
    %v1074 = vunpack.c.h.b16 %v708
    %v1075 = vunpack.c.l.b16 %v709
    %v1076 = vunpack.c.h.b16 %v709
    %v1077 = vunpack.c.l.b16 %v710
    %v1078 = vunpack.c.h.b16 %v710
    %v1079 = vunpack.c.l.b16 %v711
    %v1080 = vunpack.c.h.b16 %v711
    %v1081 = vunpack.c.l.b16 %v712
    %v1082 = vunpack.c.h.b16 %v712
    %v1083 = vunpack.c.l.b16 %v713
    %v1084 = vunpack.c.h.b16 %v713
    %v1085 = vunpack.c.l.b16 %v714
    %v1086 = vunpack.c.h.b16 %v714
    %v1087 = vunpack.c.l.b16 %v715
    %v1088 = vunpack.c.h.b16 %v715
    %v1089 = vunpack.c.l.b16 %v716
    %v1090 = vunpack.c.h.b16 %v716
    %v1091 = vunpack.c.l.b16 %v717
    %v1092 = vunpack.c.h.b16 %v717
    %v1093 = vunpack.c.l.b16 %v718
    %v1094 = vunpack.c.h.b16 %v718
    %v1095 = vunpack.c.l.b16 %v719
    %v1096 = vunpack.c.h.b16 %v719
    %v1097 = vunpack.c.l.b16 %v720
    %v1098 = vunpack.c.h.b16 %v720
    %v1099 = vunpack.c.l.b16 %v721
    %v1100 = vunpack.c.h.b16 %v721
    %v1101 = vunpack.c.l.b16 %v722
    %v1102 = vunpack.c.h.b16 %v722
    %v1103 = vunpack.c.l.b16 %v723
    %v1104 = vunpack.c.h.b16 %v723
    %v1105 = vunpack.c.l.b16 %v724
    %v1106 = vunpack.c.h.b16 %v724
    %v1107 = vunpack.c.l.b16 %v725
    %v1108 = vunpack.c.h.b16 %v725
    %v1109 = vunpack.c.l.b16 %v726
    %v1110 = vunpack.c.h.b16 %v726
    %v1111 = vunpack.c.l.b16 %v727
    %v1112 = vunpack.c.h.b16 %v727
    %v1113 = vunpack.c.l.b16 %v728
    %v1114 = vunpack.c.h.b16 %v728
    %v1115 = vunpack.c.l.b16 %v729
    %v1116 = vunpack.c.h.b16 %v729
    %v1117 = vunpack.c.l.b16 %v730
    %v1118 = vunpack.c.h.b16 %v730
    %v1119 = vunpack.c.l.b16 %v731
    %v1120 = vunpack.c.h.b16 %v731
    %v1121 = vunpack.c.l.b16 %v732
    %v1122 = vunpack.c.h.b16 %v732
    %v1123 = vunpack.c.l.b16 %v733
    %v1124 = vunpack.c.h.b16 %v733
    %v1125 = vunpack.c.l.b16 %v734
    %v1126 = vunpack.c.h.b16 %v734
    %v1127 = vunpack.c.l.b16 %v735
    %v1128 = vunpack.c.h.b16 %v735
    %v1129 = vunpack.c.l.b16 %v736
    %v1130 = vunpack.c.h.b16 %v736
    %v1131 = vunpack.c.l.b16 %v737
    %v1132 = vunpack.c.h.b16 %v737
    %v1133 = vunpack.c.l.b16 %v738
    %v1134 = vunpack.c.h.b16 %v738
    %v1135 = vunpack.c.l.b16 %v739
    %v1136 = vunpack.c.h.b16 %v739
    %v1137 = vunpack.c.l.b16 %v740
    %v1138 = vunpack.c.h.b16 %v740
    %v1139 = vunpack.c.l.b16 %v741
    %v1140 = vunpack.c.h.b16 %v741
    %v1141 = vunpack.c.l.b16 %v742
    %v1142 = vunpack.c.h.b16 %v742
    %v1143 = vunpack.c.l.b16 %v743
    %v1144 = vunpack.c.h.b16 %v743
    %v1145 = vunpack.c.l.b16 %v744
    %v1146 = vunpack.c.h.b16 %v744
    %v1147 = vunpack.c.l.b16 %v745
    %v1148 = vunpack.c.h.b16 %v745
    %v1149 = vunpack.c.l.b16 %v746
    %v1150 = vunpack.c.h.b16 %v746
    %v1151 = vunpack.c.l.b16 %v747
    %v1152 = vunpack.c.h.b16 %v747
    %v1153 = vunpack.c.l.b16 %v748
    %v1154 = vunpack.c.h.b16 %v748
    %v1155 = vpack.c.b16 %v903, %v899
    %v1156 = vpack.c.b16 %v904, %v900
    %v1157 = vpack.c.b16 %v905, %v901
    %v1158 = vpack.c.b16 %v906, %v902
    %v1159 = vpack.c.b16 %v911, %v907
    %v1160 = vpack.c.b16 %v912, %v908
    %v1161 = vpack.c.b16 %v913, %v909
    %v1162 = vpack.c.b16 %v914, %v910
    %v1163 = vpack.c.b16 %v919, %v915
    %v1164 = vpack.c.b16 %v920, %v916
    %v1165 = vpack.c.b16 %v921, %v917
    %v1166 = vpack.c.b16 %v922, %v918
    %v1167 = vpack.c.b16 %v927, %v923
    %v1168 = vpack.c.b16 %v928, %v924
    %v1169 = vpack.c.b16 %v929, %v925
    %v1170 = vpack.c.b16 %v930, %v926
    %v1171 = vpack.c.b16 %v935, %v931
    %v1172 = vpack.c.b16 %v936, %v932
    %v1173 = vpack.c.b16 %v937, %v933
    %v1174 = vpack.c.b16 %v938, %v934
    %v1175 = vpack.c.b16 %v943, %v939
    %v1176 = vpack.c.b16 %v944, %v940
    %v1177 = vpack.c.b16 %v945, %v941
    %v1178 = vpack.c.b16 %v946, %v942
    %v1179 = vpack.c.b16 %v951, %v947
    %v1180 = vpack.c.b16 %v952, %v948
    %v1181 = vpack.c.b16 %v953, %v949
    %v1182 = vpack.c.b16 %v954, %v950
    %v1183 = vpack.c.b16 %v959, %v955
    %v1184 = vpack.c.b16 %v960, %v956
    %v1185 = vpack.c.b16 %v961, %v957
    %v1186 = vpack.c.b16 %v962, %v958
    %v1187 = vpack.c.b16 %v967, %v963
    %v1188 = vpack.c.b16 %v968, %v964
    %v1189 = vpack.c.b16 %v969, %v965
    %v1190 = vpack.c.b16 %v970, %v966
    %v1191 = vpack.c.b16 %v975, %v971
    %v1192 = vpack.c.b16 %v976, %v972
    %v1193 = vpack.c.b16 %v977, %v973
    %v1194 = vpack.c.b16 %v978, %v974
    %v1195 = vpack.c.b16 %v983, %v979
    %v1196 = vpack.c.b16 %v984, %v980
    %v1197 = vpack.c.b16 %v985, %v981
    %v1198 = vpack.c.b16 %v986, %v982
    %v1199 = vpack.c.b16 %v991, %v987
    %v1200 = vpack.c.b16 %v992, %v988
    %v1201 = vpack.c.b16 %v993, %v989
    %v1202 = vpack.c.b16 %v994, %v990
    %v1203 = vpack.c.b16 %v999, %v995
    %v1204 = vpack.c.b16 %v1000, %v996
    %v1205 = vpack.c.b16 %v1001, %v997
    %v1206 = vpack.c.b16 %v1002, %v998
    %v1207 = vpack.c.b16 %v1007, %v1003
    %v1208 = vpack.c.b16 %v1008, %v1004
    %v1209 = vpack.c.b16 %v1009, %v1005
    %v1210 = vpack.c.b16 %v1010, %v1006
    %v1211 = vpack.c.b16 %v1015, %v1011
    %v1212 = vpack.c.b16 %v1016, %v1012
    %v1213 = vpack.c.b16 %v1017, %v1013
    %v1214 = vpack.c.b16 %v1018, %v1014
    %v1215 = vpack.c.b16 %v1023, %v1019
    %v1216 = vpack.c.b16 %v1024, %v1020
    %v1217 = vpack.c.b16 %v1025, %v1021
    %v1218 = vpack.c.b16 %v1026, %v1022
    %v1219 = vpack.c.b16 %v1031, %v1027
    %v1220 = vpack.c.b16 %v1032, %v1028
    %v1221 = vpack.c.b16 %v1033, %v1029
    %v1222 = vpack.c.b16 %v1034, %v1030
    %v1223 = vpack.c.b16 %v1039, %v1035
    %v1224 = vpack.c.b16 %v1040, %v1036
    %v1225 = vpack.c.b16 %v1041, %v1037
    %v1226 = vpack.c.b16 %v1042, %v1038
    %v1227 = vpack.c.b16 %v1047, %v1043
    %v1228 = vpack.c.b16 %v1048, %v1044
    %v1229 = vpack.c.b16 %v1049, %v1045
    %v1230 = vpack.c.b16 %v1050, %v1046
    %v1231 = vpack.c.b16 %v1055, %v1051
    %v1232 = vpack.c.b16 %v1056, %v1052
    %v1233 = vpack.c.b16 %v1057, %v1053
    %v1234 = vpack.c.b16 %v1058, %v1054
    %v1235 = vpack.c.b16 %v1063, %v1059
    %v1236 = vpack.c.b16 %v1064, %v1060
    %v1237 = vpack.c.b16 %v1065, %v1061
    %v1238 = vpack.c.b16 %v1066, %v1062
    %v1239 = vpack.c.b16 %v1071, %v1067
    %v1240 = vpack.c.b16 %v1072, %v1068
    %v1241 = vpack.c.b16 %v1073, %v1069
    %v1242 = vpack.c.b16 %v1074, %v1070
    %v1243 = vpack.c.b16 %v1079, %v1075
    %v1244 = vpack.c.b16 %v1080, %v1076
    %v1245 = vpack.c.b16 %v1081, %v1077
    %v1246 = vpack.c.b16 %v1082, %v1078
    %v1247 = vpack.c.b16 %v1087, %v1083
    %v1248 = vpack.c.b16 %v1088, %v1084
    %v1249 = vpack.c.b16 %v1089, %v1085
    %v1250 = vpack.c.b16 %v1090, %v1086
    %v1251 = vpack.c.b16 %v1095, %v1091
    %v1252 = vpack.c.b16 %v1096, %v1092
    %v1253 = vpack.c.b16 %v1097, %v1093
    %v1254 = vpack.c.b16 %v1098, %v1094
    %v1255 = vpack.c.b16 %v1103, %v1099
    %v1256 = vpack.c.b16 %v1104, %v1100
    %v1257 = vpack.c.b16 %v1105, %v1101
    %v1258 = vpack.c.b16 %v1106, %v1102
    %v1259 = vpack.c.b16 %v1111, %v1107
    %v1260 = vpack.c.b16 %v1112, %v1108
    %v1261 = vpack.c.b16 %v1113, %v1109
    %v1262 = vpack.c.b16 %v1114, %v1110
    %v1263 = vpack.c.b16 %v1119, %v1115
    %v1264 = vpack.c.b16 %v1120, %v1116
    %v1265 = vpack.c.b16 %v1121, %v1117
    %v1266 = vpack.c.b16 %v1122, %v1118
    %v1267 = vpack.c.b16 %v1127, %v1123
    %v1268 = vpack.c.b16 %v1128, %v1124
    %v1269 = vpack.c.b16 %v1129, %v1125
    %v1270 = vpack.c.b16 %v1130, %v1126
    %v1271 = vpack.c.b16 %v1135, %v1131
    %v1272 = vpack.c.b16 %v1136, %v1132
    %v1273 = vpack.c.b16 %v1137, %v1133
    %v1274 = vpack.c.b16 %v1138, %v1134
    %v1275 = vpack.c.b16 %v1143, %v1139
    %v1276 = vpack.c.b16 %v1144, %v1140
    %v1277 = vpack.c.b16 %v1145, %v1141
    %v1278 = vpack.c.b16 %v1146, %v1142
    %v1279 = vpack.c.b16 %v1151, %v1147
    %v1280 = vpack.c.b16 %v1152, %v1148
    %v1281 = vpack.c.b16 %v1153, %v1149
    %v1282 = vpack.c.b16 %v1154, %v1150
    %1411 = vmatprep.subr.bf16.mxu0 %v1156
    %1412 = vmatpush1.bf16.msra.mxu0 %v1155
    %1413 = vmatprep.subr.bf16.mxu0 %v1160
    %1414 = vmatpush1.bf16.msra.mxu0 %v1159
    %1415 = vmatprep.subr.bf16.mxu0 %v1164
    %1416 = vmatpush1.bf16.msra.mxu0 %v1163
    %1417 = vmatprep.subr.bf16.mxu0 %v1168
    %1418 = vmatpush1.bf16.msra.mxu0 %v1167
    %1419 = vmatprep.subr.bf16.mxu0 %v1172
    %1420 = vmatpush1.bf16.msra.mxu0 %v1171
    %1421 = vmatprep.subr.bf16.mxu0 %v1176
    %1422 = vmatpush1.bf16.msra.mxu0 %v1175
    %1423 = vmatprep.subr.bf16.mxu0 %v1180
    %1424 = vmatpush1.bf16.msra.mxu0 %v1179
    %1425 = vmatprep.subr.bf16.mxu0 %v1184
    %1426 = vmatpush1.bf16.msra.mxu0 %v1183
    %1427 = vmatprep.subr.bf16.mxu0 %v1188
    %1428 = vmatpush1.bf16.msra.mxu0 %v1187
    %1429 = vmatprep.subr.bf16.mxu0 %v1192
    %1430 = vmatpush1.bf16.msra.mxu0 %v1191
    %1431 = vmatprep.subr.bf16.mxu0 %v1196
    %1432 = vmatpush1.bf16.msra.mxu0 %v1195
    %1433 = vmatprep.subr.bf16.mxu0 %v1200
    %1434 = vmatpush1.bf16.msra.mxu0 %v1199
    %1435 = vmatprep.subr.bf16.mxu0 %v1204
    %1436 = vmatpush1.bf16.msra.mxu0 %v1203
    %1437 = vmatprep.subr.bf16.mxu0 %v1208
    %1438 = vmatpush1.bf16.msra.mxu0 %v1207
    %1439 = vmatprep.subr.bf16.mxu0 %v1212
    %1440 = vmatpush1.bf16.msra.mxu0 %v1211
    %1441 = vmatprep.subr.bf16.mxu0 %v1216
    %1442 = vmatpush1.bf16.msra.mxu0 %v1215
    %1443 = vmatprep.mubr.bf16.mxu0 %v618
    %1444 = vmatmul.mubr.bf16.gmra.mrb[0].mxu0 %v617
    %v1445 = vpop.f32.mrb[0].mxu0
    %v1446 = vadd.f32 %v754, %v1445
    %v1447 = vpop.f32.mrb[0].mxu0
    %v1448 = vadd.f32 %v758, %v1447
    %v1449 = vpop.f32.mrb[0].mxu0
    %v1450 = vpop.f32.mrb[0].mxu0
    %1451 = vdwg.mxu0
    %1452 = vmatprep.subr.bf16.mxu0 %v1220
    %1453 = vmatpush1.bf16.msra.mxu0 %v1219
    %1454 = vmatprep.subr.bf16.mxu0 %v1224
    %1455 = vmatpush1.bf16.msra.mxu0 %v1223
    %1456 = vmatprep.subr.bf16.mxu0 %v1228
    %1457 = vmatpush1.bf16.msra.mxu0 %v1227
    %1458 = vmatprep.subr.bf16.mxu0 %v1232
    %1459 = vmatpush1.bf16.msra.mxu0 %v1231
    %1460 = vmatprep.subr.bf16.mxu0 %v1236
    %1461 = vmatpush1.bf16.msra.mxu0 %v1235
    %1462 = vmatprep.subr.bf16.mxu0 %v1240
    %1463 = vmatpush1.bf16.msra.mxu0 %v1239
    %1464 = vmatprep.subr.bf16.mxu0 %v1244
    %1465 = vmatpush1.bf16.msra.mxu0 %v1243
    %1466 = vmatprep.subr.bf16.mxu0 %v1248
    %1467 = vmatpush1.bf16.msra.mxu0 %v1247
    %1468 = vmatprep.subr.bf16.mxu0 %v1252
    %1469 = vmatpush1.bf16.msra.mxu0 %v1251
    %1470 = vmatprep.subr.bf16.mxu0 %v1256
    %1471 = vmatpush1.bf16.msra.mxu0 %v1255
    %1472 = vmatprep.subr.bf16.mxu0 %v1260
    %1473 = vmatpush1.bf16.msra.mxu0 %v1259
    %1474 = vmatprep.subr.bf16.mxu0 %v1264
    %1475 = vmatpush1.bf16.msra.mxu0 %v1263
    %1476 = vmatprep.subr.bf16.mxu0 %v1268
    %1477 = vmatpush1.bf16.msra.mxu0 %v1267
    %1478 = vmatprep.subr.bf16.mxu0 %v1272
    %1479 = vmatpush1.bf16.msra.mxu0 %v1271
    %1480 = vmatprep.subr.bf16.mxu0 %v1276
    %1481 = vmatpush1.bf16.msra.mxu0 %v1275
    %1482 = vmatprep.subr.bf16.mxu0 %v1280
    %1483 = vmatpush1.bf16.msra.mxu0 %v1279
    %1484 = vmatprep.mubr.bf16.mxu0 %v620
    %1485 = vmatmul.mubr.bf16.gmra.mrb[0].mxu0 %v619
    %v1486 = vpop.f32.mrb[0].mxu0
    %v1487 = vadd.f32 %v1446, %v1486
    %v1488 = vpop.f32.mrb[0].mxu0
    %v1489 = vadd.f32 %v1448, %v1488
    %v1490 = vpop.f32.mrb[0].mxu0
    %v1491 = vpop.f32.mrb[0].mxu0
    %1492 = vdwg.mxu0
    %1493 = vmatprep.subr.bf16.mxu0 %v1158
    %1494 = vmatpush1.bf16.msra.mxu0 %v1157
    %1495 = vmatprep.subr.bf16.mxu0 %v1162
    %1496 = vmatpush1.bf16.msra.mxu0 %v1161
    %1497 = vmatprep.subr.bf16.mxu0 %v1166
    %1498 = vmatpush1.bf16.msra.mxu0 %v1165
    %1499 = vmatprep.subr.bf16.mxu0 %v1170
    %1500 = vmatpush1.bf16.msra.mxu0 %v1169
    %1501 = vmatprep.subr.bf16.mxu0 %v1174
    %1502 = vmatpush1.bf16.msra.mxu0 %v1173
    %1503 = vmatprep.subr.bf16.mxu0 %v1178
    %1504 = vmatpush1.bf16.msra.mxu0 %v1177
    %1505 = vmatprep.subr.bf16.mxu0 %v1182
    %1506 = vmatpush1.bf16.msra.mxu0 %v1181
    %1507 = vmatprep.subr.bf16.mxu0 %v1186
    %1508 = vmatpush1.bf16.msra.mxu0 %v1185
    %1509 = vmatprep.subr.bf16.mxu0 %v1190
    %1510 = vmatpush1.bf16.msra.mxu0 %v1189
    %1511 = vmatprep.subr.bf16.mxu0 %v1194
    %1512 = vmatpush1.bf16.msra.mxu0 %v1193
    %1513 = vmatprep.subr.bf16.mxu0 %v1198
    %1514 = vmatpush1.bf16.msra.mxu0 %v1197
    %1515 = vmatprep.subr.bf16.mxu0 %v1202
    %1516 = vmatpush1.bf16.msra.mxu0 %v1201
    %1517 = vmatprep.subr.bf16.mxu0 %v1206
    %1518 = vmatpush1.bf16.msra.mxu0 %v1205
    %1519 = vmatprep.subr.bf16.mxu0 %v1210
    %1520 = vmatpush1.bf16.msra.mxu0 %v1209
    %1521 = vmatprep.subr.bf16.mxu0 %v1214
    %1522 = vmatpush1.bf16.msra.mxu0 %v1213
    %1523 = vmatprep.subr.bf16.mxu0 %v1218
    %1524 = vmatpush1.bf16.msra.mxu0 %v1217
    %1525 = vmatprep.mubr.bf16.mxu0 %v618
    %1526 = vmatmul.mubr.bf16.gmra.mrb[0].mxu0 %v617
    %v1527 = vpop.f32.mrb[0].mxu0
    %v1528 = vadd.f32 %v762, %v1527
    %v1529 = vpop.f32.mrb[0].mxu0
    %v1530 = vadd.f32 %v766, %v1529
    %v1531 = vpop.f32.mrb[0].mxu0
    %v1532 = vpop.f32.mrb[0].mxu0
    %1533 = vdwg.mxu0
    %1534 = vmatprep.subr.bf16.mxu0 %v1222
    %1535 = vmatpush1.bf16.msra.mxu0 %v1221
    %1536 = vmatprep.subr.bf16.mxu0 %v1226
    %1537 = vmatpush1.bf16.msra.mxu0 %v1225
    %1538 = vmatprep.subr.bf16.mxu0 %v1230
    %1539 = vmatpush1.bf16.msra.mxu0 %v1229
    %1540 = vmatprep.subr.bf16.mxu0 %v1234
    %1541 = vmatpush1.bf16.msra.mxu0 %v1233
    %1542 = vmatprep.subr.bf16.mxu0 %v1238
    %1543 = vmatpush1.bf16.msra.mxu0 %v1237
    %1544 = vmatprep.subr.bf16.mxu0 %v1242
    %1545 = vmatpush1.bf16.msra.mxu0 %v1241
    %1546 = vmatprep.subr.bf16.mxu0 %v1246
    %1547 = vmatpush1.bf16.msra.mxu0 %v1245
    %1548 = vmatprep.subr.bf16.mxu0 %v1250
    %1549 = vmatpush1.bf16.msra.mxu0 %v1249
    %1550 = vmatprep.subr.bf16.mxu0 %v1254
    %1551 = vmatpush1.bf16.msra.mxu0 %v1253
    %1552 = vmatprep.subr.bf16.mxu0 %v1258
    %1553 = vmatpush1.bf16.msra.mxu0 %v1257
    %1554 = vmatprep.subr.bf16.mxu0 %v1262
    %1555 = vmatpush1.bf16.msra.mxu0 %v1261
    %1556 = vmatprep.subr.bf16.mxu0 %v1266
    %1557 = vmatpush1.bf16.msra.mxu0 %v1265
    %1558 = vmatprep.subr.bf16.mxu0 %v1270
    %1559 = vmatpush1.bf16.msra.mxu0 %v1269
    %1560 = vmatprep.subr.bf16.mxu0 %v1274
    %1561 = vmatpush1.bf16.msra.mxu0 %v1273
    %1562 = vmatprep.subr.bf16.mxu0 %v1278
    %1563 = vmatpush1.bf16.msra.mxu0 %v1277
    %1564 = vmatprep.subr.bf16.mxu0 %v1282
    %1565 = vmatpush1.bf16.msra.mxu0 %v1281
    %1566 = vmatprep.mubr.bf16.mxu0 %v620
    %1567 = vmatmul.mubr.bf16.gmra.mrb[0].mxu0 %v619
    %v1568 = vpop.f32.mrb[0].mxu0
    %v1569 = vadd.f32 %v1528, %v1568
    %v1570 = vpop.f32.mrb[0].mxu0
    %v1571 = vadd.f32 %v1530, %v1570
    %v1572 = vpop.f32.mrb[0].mxu0
    %v1573 = vpop.f32.mrb[0].mxu0
    %1574 = vdwg.mxu0
    %vm1575 = vcmp.ge.f32.partialorder %v1487, 0.0
    %vm1576 = vcmp.ge.f32.partialorder %v1489, 0.0
    %vm1577 = vcmp.ge.f32.partialorder %v1569, 0.0
    %vm1578 = vcmp.ge.f32.partialorder %v1571, 0.0
    %v1579 = vmul.f32 %v1487, 0.2
    %v1580 = vmul.f32 %v1489, 0.2
    %v1581 = vmul.f32 %v1569, 0.2
    %v1582 = vmul.f32 %v1571, 0.2
    %v1583 = vsel %vm1575, %v1487, %v1579
    %v1584 = vsel %vm1576, %v1489, %v1580
    %v1585 = vsel %vm1577, %v1569, %v1581
    %v1586 = vsel %vm1578, %v1571, %v1582
    %v1587 = vpack.c.bf16 %v1583, %v1583
    %v1588 = vpack.c.bf16 %v1584, %v1584
    %v1589 = vpack.c.bf16 %v1585, %v1585
    %v1590 = vpack.c.bf16 %v1586, %v1586
    %v1591 = vld [vmem:[#allocation10] sm:$0xff]
    %v1592 = vld [vmem:[#allocation10 + $0x8] sm:$0xff]
    %v1593 = vld [vmem:[#allocation10 + $0x10] sm:$0xff]
    %v1594 = vld [vmem:[#allocation10 + $0x18] sm:$0xff]
    %v1595 = vld [vmem:[#allocation10 + $0x20] sm:$0xff]
    %v1596 = vld [vmem:[#allocation10 + $0x28] sm:$0xff]
    %v1597 = vld [vmem:[#allocation10 + $0x30] sm:$0xff]
    %v1598 = vld [vmem:[#allocation10 + $0x38] sm:$0xff]
    %v1599 = vld [vmem:[#allocation10 + $0x40] sm:$0xff]
    %v1600 = vld [vmem:[#allocation10 + $0x48] sm:$0xff]
    %v1601 = vld [vmem:[#allocation10 + $0x50] sm:$0xff]
    %v1602 = vld [vmem:[#allocation10 + $0x58] sm:$0xff]
    %v1603 = vld [vmem:[#allocation10 + $0x60] sm:$0xff]
    %v1604 = vld [vmem:[#allocation10 + $0x68] sm:$0xff]
    %v1605 = vld [vmem:[#allocation10 + $0x70] sm:$0xff]
    %v1606 = vld [vmem:[#allocation10 + $0x78] sm:$0xff]
    %v1607 = vld [vmem:[#allocation10 + $0x80] sm:$0xff]
    %v1608 = vld [vmem:[#allocation10 + $0x88] sm:$0xff]
    %v1609 = vld [vmem:[#allocation10 + $0x90] sm:$0xff]
    %v1610 = vld [vmem:[#allocation10 + $0x98] sm:$0xff]
    %v1611 = vld [vmem:[#allocation10 + $0xa0] sm:$0xff]
    %v1612 = vld [vmem:[#allocation10 + $0xa8] sm:$0xff]
    %v1613 = vld [vmem:[#allocation10 + $0xb0] sm:$0xff]
    %v1614 = vld [vmem:[#allocation10 + $0xb8] sm:$0xff]
    %v1615 = vld [vmem:[#allocation10 + $0xc0] sm:$0xff]
    %v1616 = vld [vmem:[#allocation10 + $0xc8] sm:$0xff]
    %v1617 = vld [vmem:[#allocation10 + $0xd0] sm:$0xff]
    %v1618 = vld [vmem:[#allocation10 + $0xd8] sm:$0xff]
    %v1619 = vld [vmem:[#allocation10 + $0xe0] sm:$0xff]
    %v1620 = vld [vmem:[#allocation10 + $0xe8] sm:$0xff]
    %v1621 = vld [vmem:[#allocation10 + $0xf0] sm:$0xff]
    %v1622 = vld [vmem:[#allocation10 + $0xf8] sm:$0xff]
    %v1623 = vld [vmem:[#allocation10 + $0x100] sm:$0xff]
    %v1624 = vld [vmem:[#allocation10 + $0x108] sm:$0xff]
    %v1625 = vld [vmem:[#allocation10 + $0x110] sm:$0xff]
    %v1626 = vld [vmem:[#allocation10 + $0x118] sm:$0xff]
    %v1627 = vld [vmem:[#allocation10 + $0x120] sm:$0xff]
    %v1628 = vld [vmem:[#allocation10 + $0x128] sm:$0xff]
    %v1629 = vld [vmem:[#allocation10 + $0x130] sm:$0xff]
    %v1630 = vld [vmem:[#allocation10 + $0x138] sm:$0xff]
    %v1631 = vld [vmem:[#allocation10 + $0x140] sm:$0xff]
    %v1632 = vld [vmem:[#allocation10 + $0x148] sm:$0xff]
    %v1633 = vld [vmem:[#allocation10 + $0x150] sm:$0xff]
    %v1634 = vld [vmem:[#allocation10 + $0x158] sm:$0xff]
    %v1635 = vld [vmem:[#allocation10 + $0x160] sm:$0xff]
    %v1636 = vld [vmem:[#allocation10 + $0x168] sm:$0xff]
    %v1637 = vld [vmem:[#allocation10 + $0x170] sm:$0xff]
    %v1638 = vld [vmem:[#allocation10 + $0x178] sm:$0xff]
    %v1639 = vld [vmem:[#allocation10 + $0x180] sm:$0xff]
    %v1640 = vld [vmem:[#allocation10 + $0x188] sm:$0xff]
    %v1641 = vld [vmem:[#allocation10 + $0x190] sm:$0xff]
    %v1642 = vld [vmem:[#allocation10 + $0x198] sm:$0xff]
    %v1643 = vld [vmem:[#allocation10 + $0x1a0] sm:$0xff]
    %v1644 = vld [vmem:[#allocation10 + $0x1a8] sm:$0xff]
    %v1645 = vld [vmem:[#allocation10 + $0x1b0] sm:$0xff]
    %v1646 = vld [vmem:[#allocation10 + $0x1b8] sm:$0xff]
    %v1647 = vld [vmem:[#allocation10 + $0x1c0] sm:$0xff]
    %v1648 = vld [vmem:[#allocation10 + $0x1c8] sm:$0xff]
    %v1649 = vld [vmem:[#allocation10 + $0x1d0] sm:$0xff]
    %v1650 = vld [vmem:[#allocation10 + $0x1d8] sm:$0xff]
    %v1651 = vld [vmem:[#allocation10 + $0x1e0] sm:$0xff]
    %v1652 = vld [vmem:[#allocation10 + $0x1e8] sm:$0xff]
    %v1653 = vld [vmem:[#allocation10 + $0x1f0] sm:$0xff]
    %v1654 = vld [vmem:[#allocation10 + $0x1f8] sm:$0xff]
    %v1655 = vld [vmem:[#allocation10 + $0x200] sm:$0xff]
    %v1656 = vld [vmem:[#allocation10 + $0x208] sm:$0xff]
    %v1657 = vld [vmem:[#allocation10 + $0x210] sm:$0xff]
    %v1658 = vld [vmem:[#allocation10 + $0x218] sm:$0xff]
    %v1659 = vld [vmem:[#allocation10 + $0x220] sm:$0xff]
    %v1660 = vld [vmem:[#allocation10 + $0x228] sm:$0xff]
    %v1661 = vld [vmem:[#allocation10 + $0x230] sm:$0xff]
    %v1662 = vld [vmem:[#allocation10 + $0x238] sm:$0xff]
    %v1663 = vld [vmem:[#allocation10 + $0x240] sm:$0xff]
    %v1664 = vld [vmem:[#allocation10 + $0x248] sm:$0xff]
    %v1665 = vld [vmem:[#allocation10 + $0x250] sm:$0xff]
    %v1666 = vld [vmem:[#allocation10 + $0x258] sm:$0xff]
    %v1667 = vld [vmem:[#allocation10 + $0x260] sm:$0xff]
    %v1668 = vld [vmem:[#allocation10 + $0x268] sm:$0xff]
    %v1669 = vld [vmem:[#allocation10 + $0x270] sm:$0xff]
    %v1670 = vld [vmem:[#allocation10 + $0x278] sm:$0xff]
    %v1671 = vld [vmem:[#allocation10 + $0x280] sm:$0xff]
    %v1672 = vld [vmem:[#allocation10 + $0x288] sm:$0xff]
    %v1673 = vld [vmem:[#allocation10 + $0x290] sm:$0xff]
    %v1674 = vld [vmem:[#allocation10 + $0x298] sm:$0xff]
    %v1675 = vld [vmem:[#allocation10 + $0x2a0] sm:$0xff]
    %v1676 = vld [vmem:[#allocation10 + $0x2a8] sm:$0xff]
    %v1677 = vld [vmem:[#allocation10 + $0x2b0] sm:$0xff]
    %v1678 = vld [vmem:[#allocation10 + $0x2b8] sm:$0xff]
    %v1679 = vld [vmem:[#allocation10 + $0x2c0] sm:$0xff]
    %v1680 = vld [vmem:[#allocation10 + $0x2c8] sm:$0xff]
    %v1681 = vld [vmem:[#allocation10 + $0x2d0] sm:$0xff]
    %v1682 = vld [vmem:[#allocation10 + $0x2d8] sm:$0xff]
    %v1683 = vld [vmem:[#allocation10 + $0x2e0] sm:$0xff]
    %v1684 = vld [vmem:[#allocation10 + $0x2e8] sm:$0xff]
    %v1685 = vld [vmem:[#allocation10 + $0x2f0] sm:$0xff]
    %v1686 = vld [vmem:[#allocation10 + $0x2f8] sm:$0xff]
    %v1687 = vld [vmem:[#allocation10 + $0x300] sm:$0xff]
    %v1688 = vld [vmem:[#allocation10 + $0x308] sm:$0xff]
    %v1689 = vld [vmem:[#allocation10 + $0x310] sm:$0xff]
    %v1690 = vld [vmem:[#allocation10 + $0x318] sm:$0xff]
    %v1691 = vld [vmem:[#allocation10 + $0x320] sm:$0xff]
    %v1692 = vld [vmem:[#allocation10 + $0x328] sm:$0xff]
    %v1693 = vld [vmem:[#allocation10 + $0x330] sm:$0xff]
    %v1694 = vld [vmem:[#allocation10 + $0x338] sm:$0xff]
    %v1695 = vld [vmem:[#allocation10 + $0x340] sm:$0xff]
    %v1696 = vld [vmem:[#allocation10 + $0x348] sm:$0xff]
    %v1697 = vld [vmem:[#allocation10 + $0x350] sm:$0xff]
    %v1698 = vld [vmem:[#allocation10 + $0x358] sm:$0xff]
    %v1699 = vld [vmem:[#allocation10 + $0x360] sm:$0xff]
    %v1700 = vld [vmem:[#allocation10 + $0x368] sm:$0xff]
    %v1701 = vld [vmem:[#allocation10 + $0x370] sm:$0xff]
    %v1702 = vld [vmem:[#allocation10 + $0x378] sm:$0xff]
    %v1703 = vld [vmem:[#allocation10 + $0x380] sm:$0xff]
    %v1704 = vld [vmem:[#allocation10 + $0x388] sm:$0xff]
    %v1705 = vld [vmem:[#allocation10 + $0x390] sm:$0xff]
    %v1706 = vld [vmem:[#allocation10 + $0x398] sm:$0xff]
    %v1707 = vld [vmem:[#allocation10 + $0x3a0] sm:$0xff]
    %v1708 = vld [vmem:[#allocation10 + $0x3a8] sm:$0xff]
    %v1709 = vld [vmem:[#allocation10 + $0x3b0] sm:$0xff]
    %v1710 = vld [vmem:[#allocation10 + $0x3b8] sm:$0xff]
    %v1711 = vld [vmem:[#allocation10 + $0x3c0] sm:$0xff]
    %v1712 = vld [vmem:[#allocation10 + $0x3c8] sm:$0xff]
    %v1713 = vld [vmem:[#allocation10 + $0x3d0] sm:$0xff]
    %v1714 = vld [vmem:[#allocation10 + $0x3d8] sm:$0xff]
    %v1715 = vld [vmem:[#allocation10 + $0x3e0] sm:$0xff]
    %v1716 = vld [vmem:[#allocation10 + $0x3e8] sm:$0xff]
    %v1717 = vld [vmem:[#allocation10 + $0x3f0] sm:$0xff]
    %v1718 = vld [vmem:[#allocation10 + $0x3f8] sm:$0xff]
    %v1719 = vld [vmem:[%s7] sm:$0xf]
    %v1721 = vlaneseq
    %v1722 = vshrl.u32 %v1721, 7
    %v1723 = vsub.s32 0, %v1722
    %v1724 = vrot.slane %v1719, %v1723
    %v1725 = vlaneseq
    %v1726 = vshrl.u32 %v1725, 7
    %v1727 = vsub.s32 1, %v1726
    %v1728 = vrot.slane %v1719, %v1727
    %v1729 = vlaneseq
    %v1730 = vshrl.u32 %v1729, 7
    %v1731 = vsub.s32 2, %v1730
    %v1732 = vrot.slane %v1719, %v1731
    %v1733 = vlaneseq
    %v1734 = vshrl.u32 %v1733, 7
    %v1735 = vsub.s32 3, %v1734
    %v1736 = vrot.slane %v1719, %v1735
    %v1869 = vunpack.c.l.b16 %v1591
    %v1870 = vunpack.c.h.b16 %v1591
    %v1871 = vunpack.c.l.b16 %v1592
    %v1872 = vunpack.c.h.b16 %v1592
    %v1873 = vunpack.c.l.b16 %v1593
    %v1874 = vunpack.c.h.b16 %v1593
    %v1875 = vunpack.c.l.b16 %v1594
    %v1876 = vunpack.c.h.b16 %v1594
    %v1877 = vunpack.c.l.b16 %v1595
    %v1878 = vunpack.c.h.b16 %v1595
    %v1879 = vunpack.c.l.b16 %v1596
    %v1880 = vunpack.c.h.b16 %v1596
    %v1881 = vunpack.c.l.b16 %v1597
    %v1882 = vunpack.c.h.b16 %v1597
    %v1883 = vunpack.c.l.b16 %v1598
    %v1884 = vunpack.c.h.b16 %v1598
    %v1885 = vunpack.c.l.b16 %v1599
    %v1886 = vunpack.c.h.b16 %v1599
    %v1887 = vunpack.c.l.b16 %v1600
    %v1888 = vunpack.c.h.b16 %v1600
    %v1889 = vunpack.c.l.b16 %v1601
    %v1890 = vunpack.c.h.b16 %v1601
    %v1891 = vunpack.c.l.b16 %v1602
    %v1892 = vunpack.c.h.b16 %v1602
    %v1893 = vunpack.c.l.b16 %v1603
    %v1894 = vunpack.c.h.b16 %v1603
    %v1895 = vunpack.c.l.b16 %v1604
    %v1896 = vunpack.c.h.b16 %v1604
    %v1897 = vunpack.c.l.b16 %v1605
    %v1898 = vunpack.c.h.b16 %v1605
    %v1899 = vunpack.c.l.b16 %v1606
    %v1900 = vunpack.c.h.b16 %v1606
    %v1901 = vunpack.c.l.b16 %v1607
    %v1902 = vunpack.c.h.b16 %v1607
    %v1903 = vunpack.c.l.b16 %v1608
    %v1904 = vunpack.c.h.b16 %v1608
    %v1905 = vunpack.c.l.b16 %v1609
    %v1906 = vunpack.c.h.b16 %v1609
    %v1907 = vunpack.c.l.b16 %v1610
    %v1908 = vunpack.c.h.b16 %v1610
    %v1909 = vunpack.c.l.b16 %v1611
    %v1910 = vunpack.c.h.b16 %v1611
    %v1911 = vunpack.c.l.b16 %v1612
    %v1912 = vunpack.c.h.b16 %v1612
    %v1913 = vunpack.c.l.b16 %v1613
    %v1914 = vunpack.c.h.b16 %v1613
    %v1915 = vunpack.c.l.b16 %v1614
    %v1916 = vunpack.c.h.b16 %v1614
    %v1917 = vunpack.c.l.b16 %v1615
    %v1918 = vunpack.c.h.b16 %v1615
    %v1919 = vunpack.c.l.b16 %v1616
    %v1920 = vunpack.c.h.b16 %v1616
    %v1921 = vunpack.c.l.b16 %v1617
    %v1922 = vunpack.c.h.b16 %v1617
    %v1923 = vunpack.c.l.b16 %v1618
    %v1924 = vunpack.c.h.b16 %v1618
    %v1925 = vunpack.c.l.b16 %v1619
    %v1926 = vunpack.c.h.b16 %v1619
    %v1927 = vunpack.c.l.b16 %v1620
    %v1928 = vunpack.c.h.b16 %v1620
    %v1929 = vunpack.c.l.b16 %v1621
    %v1930 = vunpack.c.h.b16 %v1621
    %v1931 = vunpack.c.l.b16 %v1622
    %v1932 = vunpack.c.h.b16 %v1622
    %v1933 = vunpack.c.l.b16 %v1623
    %v1934 = vunpack.c.h.b16 %v1623
    %v1935 = vunpack.c.l.b16 %v1624
    %v1936 = vunpack.c.h.b16 %v1624
    %v1937 = vunpack.c.l.b16 %v1625
    %v1938 = vunpack.c.h.b16 %v1625
    %v1939 = vunpack.c.l.b16 %v1626
    %v1940 = vunpack.c.h.b16 %v1626
    %v1941 = vunpack.c.l.b16 %v1627
    %v1942 = vunpack.c.h.b16 %v1627
    %v1943 = vunpack.c.l.b16 %v1628
    %v1944 = vunpack.c.h.b16 %v1628
    %v1945 = vunpack.c.l.b16 %v1629
    %v1946 = vunpack.c.h.b16 %v1629
    %v1947 = vunpack.c.l.b16 %v1630
    %v1948 = vunpack.c.h.b16 %v1630
    %v1949 = vunpack.c.l.b16 %v1631
    %v1950 = vunpack.c.h.b16 %v1631
    %v1951 = vunpack.c.l.b16 %v1632
    %v1952 = vunpack.c.h.b16 %v1632
    %v1953 = vunpack.c.l.b16 %v1633
    %v1954 = vunpack.c.h.b16 %v1633
    %v1955 = vunpack.c.l.b16 %v1634
    %v1956 = vunpack.c.h.b16 %v1634
    %v1957 = vunpack.c.l.b16 %v1635
    %v1958 = vunpack.c.h.b16 %v1635
    %v1959 = vunpack.c.l.b16 %v1636
    %v1960 = vunpack.c.h.b16 %v1636
    %v1961 = vunpack.c.l.b16 %v1637
    %v1962 = vunpack.c.h.b16 %v1637
    %v1963 = vunpack.c.l.b16 %v1638
    %v1964 = vunpack.c.h.b16 %v1638
    %v1965 = vunpack.c.l.b16 %v1639
    %v1966 = vunpack.c.h.b16 %v1639
    %v1967 = vunpack.c.l.b16 %v1640
    %v1968 = vunpack.c.h.b16 %v1640
    %v1969 = vunpack.c.l.b16 %v1641
    %v1970 = vunpack.c.h.b16 %v1641
    %v1971 = vunpack.c.l.b16 %v1642
    %v1972 = vunpack.c.h.b16 %v1642
    %v1973 = vunpack.c.l.b16 %v1643
    %v1974 = vunpack.c.h.b16 %v1643
    %v1975 = vunpack.c.l.b16 %v1644
    %v1976 = vunpack.c.h.b16 %v1644
    %v1977 = vunpack.c.l.b16 %v1645
    %v1978 = vunpack.c.h.b16 %v1645
    %v1979 = vunpack.c.l.b16 %v1646
    %v1980 = vunpack.c.h.b16 %v1646
    %v1981 = vunpack.c.l.b16 %v1647
    %v1982 = vunpack.c.h.b16 %v1647
    %v1983 = vunpack.c.l.b16 %v1648
    %v1984 = vunpack.c.h.b16 %v1648
    %v1985 = vunpack.c.l.b16 %v1649
    %v1986 = vunpack.c.h.b16 %v1649
    %v1987 = vunpack.c.l.b16 %v1650
    %v1988 = vunpack.c.h.b16 %v1650
    %v1989 = vunpack.c.l.b16 %v1651
    %v1990 = vunpack.c.h.b16 %v1651
    %v1991 = vunpack.c.l.b16 %v1652
    %v1992 = vunpack.c.h.b16 %v1652
    %v1993 = vunpack.c.l.b16 %v1653
    %v1994 = vunpack.c.h.b16 %v1653
    %v1995 = vunpack.c.l.b16 %v1654
    %v1996 = vunpack.c.h.b16 %v1654
    %v1997 = vunpack.c.l.b16 %v1655
    %v1998 = vunpack.c.h.b16 %v1655
    %v1999 = vunpack.c.l.b16 %v1656
    %v2000 = vunpack.c.h.b16 %v1656
    %v2001 = vunpack.c.l.b16 %v1657
    %v2002 = vunpack.c.h.b16 %v1657
    %v2003 = vunpack.c.l.b16 %v1658
    %v2004 = vunpack.c.h.b16 %v1658
    %v2005 = vunpack.c.l.b16 %v1659
    %v2006 = vunpack.c.h.b16 %v1659
    %v2007 = vunpack.c.l.b16 %v1660
    %v2008 = vunpack.c.h.b16 %v1660
    %v2009 = vunpack.c.l.b16 %v1661
    %v2010 = vunpack.c.h.b16 %v1661
    %v2011 = vunpack.c.l.b16 %v1662
    %v2012 = vunpack.c.h.b16 %v1662
    %v2013 = vunpack.c.l.b16 %v1663
    %v2014 = vunpack.c.h.b16 %v1663
    %v2015 = vunpack.c.l.b16 %v1664
    %v2016 = vunpack.c.h.b16 %v1664
    %v2017 = vunpack.c.l.b16 %v1665
    %v2018 = vunpack.c.h.b16 %v1665
    %v2019 = vunpack.c.l.b16 %v1666
    %v2020 = vunpack.c.h.b16 %v1666
    %v2021 = vunpack.c.l.b16 %v1667
    %v2022 = vunpack.c.h.b16 %v1667
    %v2023 = vunpack.c.l.b16 %v1668
    %v2024 = vunpack.c.h.b16 %v1668
    %v2025 = vunpack.c.l.b16 %v1669
    %v2026 = vunpack.c.h.b16 %v1669
    %v2027 = vunpack.c.l.b16 %v1670
    %v2028 = vunpack.c.h.b16 %v1670
    %v2029 = vunpack.c.l.b16 %v1671
    %v2030 = vunpack.c.h.b16 %v1671
    %v2031 = vunpack.c.l.b16 %v1672
    %v2032 = vunpack.c.h.b16 %v1672
    %v2033 = vunpack.c.l.b16 %v1673
    %v2034 = vunpack.c.h.b16 %v1673
    %v2035 = vunpack.c.l.b16 %v1674
    %v2036 = vunpack.c.h.b16 %v1674
    %v2037 = vunpack.c.l.b16 %v1675
    %v2038 = vunpack.c.h.b16 %v1675
    %v2039 = vunpack.c.l.b16 %v1676
    %v2040 = vunpack.c.h.b16 %v1676
    %v2041 = vunpack.c.l.b16 %v1677
    %v2042 = vunpack.c.h.b16 %v1677
    %v2043 = vunpack.c.l.b16 %v1678
    %v2044 = vunpack.c.h.b16 %v1678
    %v2045 = vunpack.c.l.b16 %v1679
    %v2046 = vunpack.c.h.b16 %v1679
    %v2047 = vunpack.c.l.b16 %v1680
    %v2048 = vunpack.c.h.b16 %v1680
    %v2049 = vunpack.c.l.b16 %v1681
    %v2050 = vunpack.c.h.b16 %v1681
    %v2051 = vunpack.c.l.b16 %v1682
    %v2052 = vunpack.c.h.b16 %v1682
    %v2053 = vunpack.c.l.b16 %v1683
    %v2054 = vunpack.c.h.b16 %v1683
    %v2055 = vunpack.c.l.b16 %v1684
    %v2056 = vunpack.c.h.b16 %v1684
    %v2057 = vunpack.c.l.b16 %v1685
    %v2058 = vunpack.c.h.b16 %v1685
    %v2059 = vunpack.c.l.b16 %v1686
    %v2060 = vunpack.c.h.b16 %v1686
    %v2061 = vunpack.c.l.b16 %v1687
    %v2062 = vunpack.c.h.b16 %v1687
    %v2063 = vunpack.c.l.b16 %v1688
    %v2064 = vunpack.c.h.b16 %v1688
    %v2065 = vunpack.c.l.b16 %v1689
    %v2066 = vunpack.c.h.b16 %v1689
    %v2067 = vunpack.c.l.b16 %v1690
    %v2068 = vunpack.c.h.b16 %v1690
    %v2069 = vunpack.c.l.b16 %v1691
    %v2070 = vunpack.c.h.b16 %v1691
    %v2071 = vunpack.c.l.b16 %v1692
    %v2072 = vunpack.c.h.b16 %v1692
    %v2073 = vunpack.c.l.b16 %v1693
    %v2074 = vunpack.c.h.b16 %v1693
    %v2075 = vunpack.c.l.b16 %v1694
    %v2076 = vunpack.c.h.b16 %v1694
    %v2077 = vunpack.c.l.b16 %v1695
    %v2078 = vunpack.c.h.b16 %v1695
    %v2079 = vunpack.c.l.b16 %v1696
    %v2080 = vunpack.c.h.b16 %v1696
    %v2081 = vunpack.c.l.b16 %v1697
    %v2082 = vunpack.c.h.b16 %v1697
    %v2083 = vunpack.c.l.b16 %v1698
    %v2084 = vunpack.c.h.b16 %v1698
    %v2085 = vunpack.c.l.b16 %v1699
    %v2086 = vunpack.c.h.b16 %v1699
    %v2087 = vunpack.c.l.b16 %v1700
    %v2088 = vunpack.c.h.b16 %v1700
    %v2089 = vunpack.c.l.b16 %v1701
    %v2090 = vunpack.c.h.b16 %v1701
    %v2091 = vunpack.c.l.b16 %v1702
    %v2092 = vunpack.c.h.b16 %v1702
    %v2093 = vunpack.c.l.b16 %v1703
    %v2094 = vunpack.c.h.b16 %v1703
    %v2095 = vunpack.c.l.b16 %v1704
    %v2096 = vunpack.c.h.b16 %v1704
    %v2097 = vunpack.c.l.b16 %v1705
    %v2098 = vunpack.c.h.b16 %v1705
    %v2099 = vunpack.c.l.b16 %v1706
    %v2100 = vunpack.c.h.b16 %v1706
    %v2101 = vunpack.c.l.b16 %v1707
    %v2102 = vunpack.c.h.b16 %v1707
    %v2103 = vunpack.c.l.b16 %v1708
    %v2104 = vunpack.c.h.b16 %v1708
    %v2105 = vunpack.c.l.b16 %v1709
    %v2106 = vunpack.c.h.b16 %v1709
    %v2107 = vunpack.c.l.b16 %v1710
    %v2108 = vunpack.c.h.b16 %v1710
    %v2109 = vunpack.c.l.b16 %v1711
    %v2110 = vunpack.c.h.b16 %v1711
    %v2111 = vunpack.c.l.b16 %v1712
    %v2112 = vunpack.c.h.b16 %v1712
    %v2113 = vunpack.c.l.b16 %v1713
    %v2114 = vunpack.c.h.b16 %v1713
    %v2115 = vunpack.c.l.b16 %v1714
    %v2116 = vunpack.c.h.b16 %v1714
    %v2117 = vunpack.c.l.b16 %v1715
    %v2118 = vunpack.c.h.b16 %v1715
    %v2119 = vunpack.c.l.b16 %v1716
    %v2120 = vunpack.c.h.b16 %v1716
    %v2121 = vunpack.c.l.b16 %v1717
    %v2122 = vunpack.c.h.b16 %v1717
    %v2123 = vunpack.c.l.b16 %v1718
    %v2124 = vunpack.c.h.b16 %v1718
    %v2125 = vpack.c.b16 %v1873, %v1869
    %v2126 = vpack.c.b16 %v1874, %v1870
    %v2127 = vpack.c.b16 %v1875, %v1871
    %v2128 = vpack.c.b16 %v1876, %v1872
    %v2129 = vpack.c.b16 %v1881, %v1877
    %v2130 = vpack.c.b16 %v1882, %v1878
    %v2131 = vpack.c.b16 %v1883, %v1879
    %v2132 = vpack.c.b16 %v1884, %v1880
    %v2133 = vpack.c.b16 %v1889, %v1885
    %v2134 = vpack.c.b16 %v1890, %v1886
    %v2135 = vpack.c.b16 %v1891, %v1887
    %v2136 = vpack.c.b16 %v1892, %v1888
    %v2137 = vpack.c.b16 %v1897, %v1893
    %v2138 = vpack.c.b16 %v1898, %v1894
    %v2139 = vpack.c.b16 %v1899, %v1895
    %v2140 = vpack.c.b16 %v1900, %v1896
    %v2141 = vpack.c.b16 %v1905, %v1901
    %v2142 = vpack.c.b16 %v1906, %v1902
    %v2143 = vpack.c.b16 %v1907, %v1903
    %v2144 = vpack.c.b16 %v1908, %v1904
    %v2145 = vpack.c.b16 %v1913, %v1909
    %v2146 = vpack.c.b16 %v1914, %v1910
    %v2147 = vpack.c.b16 %v1915, %v1911
    %v2148 = vpack.c.b16 %v1916, %v1912
    %v2149 = vpack.c.b16 %v1921, %v1917
    %v2150 = vpack.c.b16 %v1922, %v1918
    %v2151 = vpack.c.b16 %v1923, %v1919
    %v2152 = vpack.c.b16 %v1924, %v1920
    %v2153 = vpack.c.b16 %v1929, %v1925
    %v2154 = vpack.c.b16 %v1930, %v1926
    %v2155 = vpack.c.b16 %v1931, %v1927
    %v2156 = vpack.c.b16 %v1932, %v1928
    %v2157 = vpack.c.b16 %v1937, %v1933
    %v2158 = vpack.c.b16 %v1938, %v1934
    %v2159 = vpack.c.b16 %v1939, %v1935
    %v2160 = vpack.c.b16 %v1940, %v1936
    %v2161 = vpack.c.b16 %v1945, %v1941
    %v2162 = vpack.c.b16 %v1946, %v1942
    %v2163 = vpack.c.b16 %v1947, %v1943
    %v2164 = vpack.c.b16 %v1948, %v1944
    %v2165 = vpack.c.b16 %v1953, %v1949
    %v2166 = vpack.c.b16 %v1954, %v1950
    %v2167 = vpack.c.b16 %v1955, %v1951
    %v2168 = vpack.c.b16 %v1956, %v1952
    %v2169 = vpack.c.b16 %v1961, %v1957
    %v2170 = vpack.c.b16 %v1962, %v1958
    %v2171 = vpack.c.b16 %v1963, %v1959
    %v2172 = vpack.c.b16 %v1964, %v1960
    %v2173 = vpack.c.b16 %v1969, %v1965
    %v2174 = vpack.c.b16 %v1970, %v1966
    %v2175 = vpack.c.b16 %v1971, %v1967
    %v2176 = vpack.c.b16 %v1972, %v1968
    %v2177 = vpack.c.b16 %v1977, %v1973
    %v2178 = vpack.c.b16 %v1978, %v1974
    %v2179 = vpack.c.b16 %v1979, %v1975
    %v2180 = vpack.c.b16 %v1980, %v1976
    %v2181 = vpack.c.b16 %v1985, %v1981
    %v2182 = vpack.c.b16 %v1986, %v1982
    %v2183 = vpack.c.b16 %v1987, %v1983
    %v2184 = vpack.c.b16 %v1988, %v1984
    %v2185 = vpack.c.b16 %v1993, %v1989
    %v2186 = vpack.c.b16 %v1994, %v1990
    %v2187 = vpack.c.b16 %v1995, %v1991
    %v2188 = vpack.c.b16 %v1996, %v1992
    %v2189 = vpack.c.b16 %v2001, %v1997
    %v2190 = vpack.c.b16 %v2002, %v1998
    %v2191 = vpack.c.b16 %v2003, %v1999
    %v2192 = vpack.c.b16 %v2004, %v2000
    %v2193 = vpack.c.b16 %v2009, %v2005
    %v2194 = vpack.c.b16 %v2010, %v2006
    %v2195 = vpack.c.b16 %v2011, %v2007
    %v2196 = vpack.c.b16 %v2012, %v2008
    %v2197 = vpack.c.b16 %v2017, %v2013
    %v2198 = vpack.c.b16 %v2018, %v2014
    %v2199 = vpack.c.b16 %v2019, %v2015
    %v2200 = vpack.c.b16 %v2020, %v2016
    %v2201 = vpack.c.b16 %v2025, %v2021
    %v2202 = vpack.c.b16 %v2026, %v2022
    %v2203 = vpack.c.b16 %v2027, %v2023
    %v2204 = vpack.c.b16 %v2028, %v2024
    %v2205 = vpack.c.b16 %v2033, %v2029
    %v2206 = vpack.c.b16 %v2034, %v2030
    %v2207 = vpack.c.b16 %v2035, %v2031
    %v2208 = vpack.c.b16 %v2036, %v2032
    %v2209 = vpack.c.b16 %v2041, %v2037
    %v2210 = vpack.c.b16 %v2042, %v2038
    %v2211 = vpack.c.b16 %v2043, %v2039
    %v2212 = vpack.c.b16 %v2044, %v2040
    %v2213 = vpack.c.b16 %v2049, %v2045
    %v2214 = vpack.c.b16 %v2050, %v2046
    %v2215 = vpack.c.b16 %v2051, %v2047
    %v2216 = vpack.c.b16 %v2052, %v2048
    %v2217 = vpack.c.b16 %v2057, %v2053
    %v2218 = vpack.c.b16 %v2058, %v2054
    %v2219 = vpack.c.b16 %v2059, %v2055
    %v2220 = vpack.c.b16 %v2060, %v2056
    %v2221 = vpack.c.b16 %v2065, %v2061
    %v2222 = vpack.c.b16 %v2066, %v2062
    %v2223 = vpack.c.b16 %v2067, %v2063
    %v2224 = vpack.c.b16 %v2068, %v2064
    %v2225 = vpack.c.b16 %v2073, %v2069
    %v2226 = vpack.c.b16 %v2074, %v2070
    %v2227 = vpack.c.b16 %v2075, %v2071
    %v2228 = vpack.c.b16 %v2076, %v2072
    %v2229 = vpack.c.b16 %v2081, %v2077
    %v2230 = vpack.c.b16 %v2082, %v2078
    %v2231 = vpack.c.b16 %v2083, %v2079
    %v2232 = vpack.c.b16 %v2084, %v2080
    %v2233 = vpack.c.b16 %v2089, %v2085
    %v2234 = vpack.c.b16 %v2090, %v2086
    %v2235 = vpack.c.b16 %v2091, %v2087
    %v2236 = vpack.c.b16 %v2092, %v2088
    %v2237 = vpack.c.b16 %v2097, %v2093
    %v2238 = vpack.c.b16 %v2098, %v2094
    %v2239 = vpack.c.b16 %v2099, %v2095
    %v2240 = vpack.c.b16 %v2100, %v2096
    %v2241 = vpack.c.b16 %v2105, %v2101
    %v2242 = vpack.c.b16 %v2106, %v2102
    %v2243 = vpack.c.b16 %v2107, %v2103
    %v2244 = vpack.c.b16 %v2108, %v2104
    %v2245 = vpack.c.b16 %v2113, %v2109
    %v2246 = vpack.c.b16 %v2114, %v2110
    %v2247 = vpack.c.b16 %v2115, %v2111
    %v2248 = vpack.c.b16 %v2116, %v2112
    %v2249 = vpack.c.b16 %v2121, %v2117
    %v2250 = vpack.c.b16 %v2122, %v2118
    %v2251 = vpack.c.b16 %v2123, %v2119
    %v2252 = vpack.c.b16 %v2124, %v2120
    %2381 = vmatprep.subr.bf16.mxu0 %v2126
    %2382 = vmatpush1.bf16.msra.mxu0 %v2125
    %2383 = vmatprep.subr.bf16.mxu0 %v2130
    %2384 = vmatpush1.bf16.msra.mxu0 %v2129
    %2385 = vmatprep.subr.bf16.mxu0 %v2134
    %2386 = vmatpush1.bf16.msra.mxu0 %v2133
    %2387 = vmatprep.subr.bf16.mxu0 %v2138
    %2388 = vmatpush1.bf16.msra.mxu0 %v2137
    %2389 = vmatprep.subr.bf16.mxu0 %v2142
    %2390 = vmatpush1.bf16.msra.mxu0 %v2141
    %2391 = vmatprep.subr.bf16.mxu0 %v2146
    %2392 = vmatpush1.bf16.msra.mxu0 %v2145
    %2393 = vmatprep.subr.bf16.mxu0 %v2150
    %2394 = vmatpush1.bf16.msra.mxu0 %v2149
    %2395 = vmatprep.subr.bf16.mxu0 %v2154
    %2396 = vmatpush1.bf16.msra.mxu0 %v2153
    %2397 = vmatprep.subr.bf16.mxu0 %v2158
    %2398 = vmatpush1.bf16.msra.mxu0 %v2157
    %2399 = vmatprep.subr.bf16.mxu0 %v2162
    %2400 = vmatpush1.bf16.msra.mxu0 %v2161
    %2401 = vmatprep.subr.bf16.mxu0 %v2166
    %2402 = vmatpush1.bf16.msra.mxu0 %v2165
    %2403 = vmatprep.subr.bf16.mxu0 %v2170
    %2404 = vmatpush1.bf16.msra.mxu0 %v2169
    %2405 = vmatprep.subr.bf16.mxu0 %v2174
    %2406 = vmatpush1.bf16.msra.mxu0 %v2173
    %2407 = vmatprep.subr.bf16.mxu0 %v2178
    %2408 = vmatpush1.bf16.msra.mxu0 %v2177
    %2409 = vmatprep.subr.bf16.mxu0 %v2182
    %2410 = vmatpush1.bf16.msra.mxu0 %v2181
    %2411 = vmatprep.subr.bf16.mxu0 %v2186
    %2412 = vmatpush1.bf16.msra.mxu0 %v2185
    %2413 = vmatprep.mubr.bf16.mxu0 %v1588
    %2414 = vmatmul.mubr.bf16.gmra.mrb[0].mxu0 %v1587
    %v2415 = vpop.f32.mrb[0].mxu0
    %v2416 = vadd.f32 %v1724, %v2415
    %v2417 = vpop.f32.mrb[0].mxu0
    %v2418 = vadd.f32 %v1728, %v2417
    %v2419 = vpop.f32.mrb[0].mxu0
    %v2420 = vpop.f32.mrb[0].mxu0
    %2421 = vdwg.mxu0
    %2422 = vmatprep.subr.bf16.mxu0 %v2190
    %2423 = vmatpush1.bf16.msra.mxu0 %v2189
    %2424 = vmatprep.subr.bf16.mxu0 %v2194
    %2425 = vmatpush1.bf16.msra.mxu0 %v2193
    %2426 = vmatprep.subr.bf16.mxu0 %v2198
    %2427 = vmatpush1.bf16.msra.mxu0 %v2197
    %2428 = vmatprep.subr.bf16.mxu0 %v2202
    %2429 = vmatpush1.bf16.msra.mxu0 %v2201
    %2430 = vmatprep.subr.bf16.mxu0 %v2206
    %2431 = vmatpush1.bf16.msra.mxu0 %v2205
    %2432 = vmatprep.subr.bf16.mxu0 %v2210
    %2433 = vmatpush1.bf16.msra.mxu0 %v2209
    %2434 = vmatprep.subr.bf16.mxu0 %v2214
    %2435 = vmatpush1.bf16.msra.mxu0 %v2213
    %2436 = vmatprep.subr.bf16.mxu0 %v2218
    %2437 = vmatpush1.bf16.msra.mxu0 %v2217
    %2438 = vmatprep.subr.bf16.mxu0 %v2222
    %2439 = vmatpush1.bf16.msra.mxu0 %v2221
    %2440 = vmatprep.subr.bf16.mxu0 %v2226
    %2441 = vmatpush1.bf16.msra.mxu0 %v2225
    %2442 = vmatprep.subr.bf16.mxu0 %v2230
    %2443 = vmatpush1.bf16.msra.mxu0 %v2229
    %2444 = vmatprep.subr.bf16.mxu0 %v2234
    %2445 = vmatpush1.bf16.msra.mxu0 %v2233
    %2446 = vmatprep.subr.bf16.mxu0 %v2238
    %2447 = vmatpush1.bf16.msra.mxu0 %v2237
    %2448 = vmatprep.subr.bf16.mxu0 %v2242
    %2449 = vmatpush1.bf16.msra.mxu0 %v2241
    %2450 = vmatprep.subr.bf16.mxu0 %v2246
    %2451 = vmatpush1.bf16.msra.mxu0 %v2245
    %2452 = vmatprep.subr.bf16.mxu0 %v2250
    %2453 = vmatpush1.bf16.msra.mxu0 %v2249
    %2454 = vmatprep.mubr.bf16.mxu0 %v1590
    %2455 = vmatmul.mubr.bf16.gmra.mrb[0].mxu0 %v1589
    %v2456 = vpop.f32.mrb[0].mxu0
    %v2457 = vadd.f32 %v2416, %v2456
    %v2458 = vpop.f32.mrb[0].mxu0
    %v2459 = vadd.f32 %v2418, %v2458
    %v2460 = vpop.f32.mrb[0].mxu0
    %v2461 = vpop.f32.mrb[0].mxu0
    %2462 = vdwg.mxu0
    %2463 = vmatprep.subr.bf16.mxu0 %v2128
    %2464 = vmatpush1.bf16.msra.mxu0 %v2127
    %2465 = vmatprep.subr.bf16.mxu0 %v2132
    %2466 = vmatpush1.bf16.msra.mxu0 %v2131
    %2467 = vmatprep.subr.bf16.mxu0 %v2136
    %2468 = vmatpush1.bf16.msra.mxu0 %v2135
    %2469 = vmatprep.subr.bf16.mxu0 %v2140
    %2470 = vmatpush1.bf16.msra.mxu0 %v2139
    %2471 = vmatprep.subr.bf16.mxu0 %v2144
    %2472 = vmatpush1.bf16.msra.mxu0 %v2143
    %2473 = vmatprep.subr.bf16.mxu0 %v2148
    %2474 = vmatpush1.bf16.msra.mxu0 %v2147
    %2475 = vmatprep.subr.bf16.mxu0 %v2152
    %2476 = vmatpush1.bf16.msra.mxu0 %v2151
    %2477 = vmatprep.subr.bf16.mxu0 %v2156
    %2478 = vmatpush1.bf16.msra.mxu0 %v2155
    %2479 = vmatprep.subr.bf16.mxu0 %v2160
    %2480 = vmatpush1.bf16.msra.mxu0 %v2159
    %2481 = vmatprep.subr.bf16.mxu0 %v2164
    %2482 = vmatpush1.bf16.msra.mxu0 %v2163
    %2483 = vmatprep.subr.bf16.mxu0 %v2168
    %2484 = vmatpush1.bf16.msra.mxu0 %v2167
    %2485 = vmatprep.subr.bf16.mxu0 %v2172
    %2486 = vmatpush1.bf16.msra.mxu0 %v2171
    %2487 = vmatprep.subr.bf16.mxu0 %v2176
    %2488 = vmatpush1.bf16.msra.mxu0 %v2175
    %2489 = vmatprep.subr.bf16.mxu0 %v2180
    %2490 = vmatpush1.bf16.msra.mxu0 %v2179
    %2491 = vmatprep.subr.bf16.mxu0 %v2184
    %2492 = vmatpush1.bf16.msra.mxu0 %v2183
    %2493 = vmatprep.subr.bf16.mxu0 %v2188
    %2494 = vmatpush1.bf16.msra.mxu0 %v2187
    %2495 = vmatprep.mubr.bf16.mxu0 %v1588
    %2496 = vmatmul.mubr.bf16.gmra.mrb[0].mxu0 %v1587
    %v2497 = vpop.f32.mrb[0].mxu0
    %v2498 = vadd.f32 %v1732, %v2497
    %v2499 = vpop.f32.mrb[0].mxu0
    %v2500 = vadd.f32 %v1736, %v2499
    %v2501 = vpop.f32.mrb[0].mxu0
    %v2502 = vpop.f32.mrb[0].mxu0
    %2503 = vdwg.mxu0
    %2504 = vmatprep.subr.bf16.mxu0 %v2192
    %2505 = vmatpush1.bf16.msra.mxu0 %v2191
    %2506 = vmatprep.subr.bf16.mxu0 %v2196
    %2507 = vmatpush1.bf16.msra.mxu0 %v2195
    %2508 = vmatprep.subr.bf16.mxu0 %v2200
    %2509 = vmatpush1.bf16.msra.mxu0 %v2199
    %2510 = vmatprep.subr.bf16.mxu0 %v2204
    %2511 = vmatpush1.bf16.msra.mxu0 %v2203
    %2512 = vmatprep.subr.bf16.mxu0 %v2208
    %2513 = vmatpush1.bf16.msra.mxu0 %v2207
    %2514 = vmatprep.subr.bf16.mxu0 %v2212
    %2515 = vmatpush1.bf16.msra.mxu0 %v2211
    %2516 = vmatprep.subr.bf16.mxu0 %v2216
    %2517 = vmatpush1.bf16.msra.mxu0 %v2215
    %2518 = vmatprep.subr.bf16.mxu0 %v2220
    %2519 = vmatpush1.bf16.msra.mxu0 %v2219
    %2520 = vmatprep.subr.bf16.mxu0 %v2224
    %2521 = vmatpush1.bf16.msra.mxu0 %v2223
    %2522 = vmatprep.subr.bf16.mxu0 %v2228
    %2523 = vmatpush1.bf16.msra.mxu0 %v2227
    %2524 = vmatprep.subr.bf16.mxu0 %v2232
    %2525 = vmatpush1.bf16.msra.mxu0 %v2231
    %2526 = vmatprep.subr.bf16.mxu0 %v2236
    %2527 = vmatpush1.bf16.msra.mxu0 %v2235
    %2528 = vmatprep.subr.bf16.mxu0 %v2240
    %2529 = vmatpush1.bf16.msra.mxu0 %v2239
    %2530 = vmatprep.subr.bf16.mxu0 %v2244
    %2531 = vmatpush1.bf16.msra.mxu0 %v2243
    %2532 = vmatprep.subr.bf16.mxu0 %v2248
    %2533 = vmatpush1.bf16.msra.mxu0 %v2247
    %2534 = vmatprep.subr.bf16.mxu0 %v2252
    %2535 = vmatpush1.bf16.msra.mxu0 %v2251
    %2536 = vmatprep.mubr.bf16.mxu0 %v1590
    %2537 = vmatmul.mubr.bf16.gmra.mrb[0].mxu0 %v1589
    %v2538 = vpop.f32.mrb[0].mxu0
    %v2539 = vadd.f32 %v2498, %v2538
    %v2540 = vpop.f32.mrb[0].mxu0
    %v2541 = vadd.f32 %v2500, %v2540
    %v2542 = vpop.f32.mrb[0].mxu0
    %v2543 = vpop.f32.mrb[0].mxu0
    %2544 = vdwg.mxu0
    %vm2545 = vcmp.ge.f32.partialorder %v2457, 0.0
    %vm2546 = vcmp.ge.f32.partialorder %v2459, 0.0
    %vm2547 = vcmp.ge.f32.partialorder %v2539, 0.0
    %vm2548 = vcmp.ge.f32.partialorder %v2541, 0.0
    %v2549 = vmul.f32 %v2457, 0.2
    %v2550 = vmul.f32 %v2459, 0.2
    %v2551 = vmul.f32 %v2539, 0.2
    %v2552 = vmul.f32 %v2541, 0.2
    %v2553 = vsel %vm2545, %v2457, %v2549
    %v2554 = vsel %vm2546, %v2459, %v2550
    %v2555 = vsel %vm2547, %v2539, %v2551
    %v2556 = vsel %vm2548, %v2541, %v2552
    %v2557 = vld [vmem:[%s8] sm:$0xf]
    %v2559 = vlaneseq
    %v2560 = vshrl.u32 %v2559, 7
    %v2561 = vsub.s32 0, %v2560
    %v2562 = vrot.slane %v2557, %v2561
    %v2563 = vlaneseq
    %v2564 = vshrl.u32 %v2563, 7
    %v2565 = vsub.s32 1, %v2564
    %v2566 = vrot.slane %v2557, %v2565
    %v2567 = vlaneseq
    %v2568 = vshrl.u32 %v2567, 7
    %v2569 = vsub.s32 2, %v2568
    %v2570 = vrot.slane %v2557, %v2569
    %v2571 = vlaneseq
    %v2572 = vshrl.u32 %v2571, 7
    %v2573 = vsub.s32 3, %v2572
    %v2574 = vrot.slane %v2557, %v2573
    %v2579 = vmul.f32 %v2553, %v2562
    %v2580 = vmul.f32 %v2554, %v2566
    %v2581 = vmul.f32 %v2555, %v2570
    %v2582 = vmul.f32 %v2556, %v2574
    %v2583 = vadd.f32 %v2579, %v2580
    %v2584 = vadd.f32 %v2583, %v2581
    %v2585 = vadd.f32 %v2584, %v2582
    %2586 = vadd.xlane.f32.xlu0 %v2585
    %v2587 = vpop.xlane.xlu0 %2586
    %v2588 = vld [vmem:[#allocation2] sm:$0x1]
    %v2590 = vlaneseq
    %v2591 = vshrl.u32 %v2590, 7
    %v2592 = vsub.s32 0, %v2591
    %v2593 = vrot.slane %v2588, %v2592
    %v2595 = vadd.f32 %v2587, %v2593
    %vm2596 = vcmask 7168
    %2597 = vst.msk [vmem:[%s10] sm:$0xff] %vm2596, %v2595
    // Predicated region
    $region62: #{tpu_custom_call.1} parent=1 // pred_check
      _
    $region63: #{tpu_custom_call.1} parent=1 // pred_check_branch
      %2599 = sbr.rel (0) target = $region65
    $region64: #{tpu_custom_call.1} parent=1 // pred_region
      _
    $region65: #{tpu_custom_call.1} parent=1 // pred_fallthru
      _
    // Predicated region
    $region66: #{tpu_custom_call.1} parent=1 // pred_check
      _
    $region67: #{tpu_custom_call.1} parent=1 // pred_check_branch
      %2601 = sbr.rel (0) target = $region69
    $region68: #{tpu_custom_call.1} parent=1 // pred_region
      _
    $region69: #{tpu_custom_call.1} parent=1 // pred_fallthru
      _
    %2602 = vsyncpa [#allocation4], 1
    %2603 = vsyncpa [#allocation6], 1
    %2604 = vsyncpa [#allocation9], 1

</llo_original>
